<compile_context>
chip_gen: v5e
topology: v5e:2x2
jax: 0.10.0
libtpu: 0.0.40
codegen_flags: <defaults>
</compile_context>

<pallas_src>
import functools

import jax
import jax.numpy as jnp
from jax import lax
from jax.experimental import pallas as pl
from jax.experimental.pallas import tpu as pltpu

BN_EPS = 1e-5


def _round_up(x, m):
    return (x + m - 1) // m * m


# ---------------------------------------------------------------------------
# Kernel 1: 3x3 conv (+ bias) via 9 accumulating MXU dots over an in-VMEM
#           halo tile; optional fused per-tile channel sum / sum-of-squares.
# ---------------------------------------------------------------------------
def _conv_kernel(x_ref, w_ref, b_ref, *out_refs, rt, W, Cout, with_stats):
    # x_ref:    (1, rt+2, W+2, Cin_p)   compute dtype
    # w_ref:    (9, Cin_p, Cp)          compute dtype
    # b_ref:    (1, Cp)                 f32
    # out_refs: y_ref (1, Cout, rt*W) [+ stat_ref (1, 2, Cp) when with_stats]
    cin_p = x_ref.shape[-1]
    L = rt * W

    acc = None
    for t in range(9):
        dh, dw = t // 3, t % 3
        # In-kernel im2col: shifted window of the halo'd tile -> (L, Cin_p).
        tap = x_ref[0, dh:dh + rt, dw:dw + W, :].reshape(L, cin_p)
        d = jnp.dot(tap, w_ref[t], preferred_element_type=jnp.float32)
        acc = d if acc is None else acc + d
    acc = acc + b_ref[...]                                  # (L, Cp) + (1, Cp)

    if with_stats:
        y_ref, stat_ref = out_refs
        s = jnp.sum(acc, axis=0, keepdims=True)             # (1, Cp)
        ss = jnp.sum(acc * acc, axis=0, keepdims=True)      # (1, Cp)
        stat_ref[0] = jnp.concatenate([s, ss], axis=0)      # (2, Cp)
    else:
        (y_ref,) = out_refs

    # XLU transpose: channels -> sublanes, H*W -> lanes (lane-dense NCHW-flat),
    # then drop the padded channels so only Cout rows ever hit HBM.
    y_ref[0] = jnp.transpose(acc)[:Cout, :].astype(y_ref.dtype)


# ---------------------------------------------------------------------------
# Kernel 2: y * scale + shift, ReLU (BN scale/shift precomputed XLA-side).
# ---------------------------------------------------------------------------
def _bn_relu_kernel(y_ref, scale_ref, shift_ref, o_ref):
    # y_ref/o_ref: (1, Cout, L)   scale/shift: (Cout, 1) f32 (lane-broadcast)
    y = y_ref[0].astype(jnp.float32)
    o_ref[0] = jnp.maximum(y * scale_ref[...] + shift_ref[...], 0.0).astype(o_ref.dtype)


# ---------------------------------------------------------------------------
# Wrapper
# ---------------------------------------------------------------------------
def conv_block_forward(x_nchw, weight_oihw, bias, gamma, beta, act=True,
                       compute_dtype=jnp.bfloat16, row_tiles=None):
    """Forward of conv_block. x_nchw: (N, Cin, H, W) f32 -> (N, Cout, H, W) f32."""
    N, Cin, H, W = x_nchw.shape
    Cout = weight_oihw.shape[0]
    HW = H * W
    Hp, Wp = H + 2, W + 2

    itemsize = jnp.dtype(compute_dtype).itemsize
    sub_pack = (8 * 4) // itemsize                 # 8 for f32, 16 for bf16
    Cin_p = _round_up(Cin, sub_pack)               # NOT padded to 128 any more
    Cp = _round_up(Cout, 128)                      # lane-dense matmul/stat width (VMEM only)
    y_dtype = compute_dtype if act else jnp.float32

    # ---- row-tile (with halo) selection: keep per-step VMEM modest ---------
    def step_bytes(rt):
        x_blk = (rt + 2) * _round_up(Wp, 8) * _round_up(Cin_p, 128) * itemsize
        w_blk = 9 * Cin_p * Cp * itemsize
        acc = rt * W * Cp * 4
        y_blk = _round_up(Cout, 8) * _round_up(rt * W, 128) * jnp.dtype(y_dtype).itemsize
        return 2 * (x_blk + y_blk) + w_blk + 3 * acc   # 2x: double-buffered I/O

    budget = 16 * 1024 * 1024                      # conservative: v7x has only 64 MiB VMEM
    if row_tiles is None:
        T = 1
        for cand in range(1, H + 1):
            if H % cand:
                continue
            rt_c = H // cand
            if cand > 1 and (rt_c * W) % 128 != 0:  # keep output blocks lane-dense
                continue
            T = cand
            if step_bytes(rt_c) <= budget:
                break
    else:
        T = int(row_tiles)
        if H % T or (T > 1 and ((H // T) * W) % 128 != 0):
            raise ValueError(f"row_tiles={T} invalid for H={H}, W={W}")
    rt = H // T
    L = rt * W
    vmem_limit = int(min(56 * 1024 * 1024, max(32 * 1024 * 1024, 3 * step_bytes(rt))))

    # ---- XLA-side layout prep: one cheap pass over the input ---------------
    x = jnp.transpose(x_nchw, (0, 2, 3, 1)).astype(compute_dtype)   # NHWC, compute dtype
    xp = jnp.pad(x, ((0, 0), (1, 1), (1, 1), (0, Cin_p - Cin)))     # spatial halo + Cin pad
    if T == 1:
        x_tiles = xp                                                # (N, Hp, Wp, Cin_p)
    else:                                                           # overlapping row tiles
        x_tiles = jnp.stack([xp[:, t * rt:t * rt + rt + 2] for t in range(T)], axis=1)
        x_tiles = x_tiles.reshape(N * T, rt + 2, Wp, Cin_p)

    # OIHW -> (kh, kw, ci, o) -> (9, Cin, Cout), zero-padded to (9, Cin_p, Cp).
    w = jnp.transpose(weight_oihw, (2, 3, 1, 0)).reshape(9, Cin, Cout)
    w9 = jnp.zeros((9, Cin_p, Cp), jnp.float32).at[:, :Cin, :Cout].set(w)
    w9 = w9.astype(compute_dtype)
    bias_p = jnp.pad(bias.astype(jnp.float32), (0, Cp - Cout)).reshape(1, Cp)

    # ---- conv kernel --------------------------------------------------------
    grid = (N, T)
    x_spec = pl.BlockSpec((1, rt + 2, Wp, Cin_p), lambda n, t: (n * T + t, 0, 0, 0))
    w_spec = pl.BlockSpec((9, Cin_p, Cp), lambda n, t: (0, 0, 0))
    b_spec = pl.BlockSpec((1, Cp), lambda n, t: (0, 0))
    y_spec = pl.BlockSpec((1, Cout, L), lambda n, t: (n, 0, t))
    stat_spec = pl.BlockSpec((1, 2, Cp), lambda n, t: (n * T + t, 0, 0))

    conv_cost = pl.CostEstimate(
        flops=2 * N * HW * 9 * Cin_p * Cp,
        transcendentals=0,
        bytes_accessed=int(N * T * (rt + 2) * Wp * Cin_p * itemsize
                           + 9 * Cin_p * Cp * itemsize
                           + N * Cout * HW * jnp.dtype(y_dtype).itemsize
                           + (N * T * 2 * Cp * 4 if act else 0)))
    cparams = pltpu.CompilerParams(
        dimension_semantics=("parallel", "parallel"),   # per-tile stats -> megacore-safe
        vmem_limit_bytes=vmem_limit)

    conv_kernel = functools.partial(_conv_kernel, rt=rt, W=W, Cout=Cout, with_stats=act)

    if act:
        y, stats = pl.pallas_call(
            conv_kernel,
            out_shape=(jax.ShapeDtypeStruct((N, Cout, HW), y_dtype),
                       jax.ShapeDtypeStruct((N * T, 2, Cp), jnp.float32)),
            grid=grid,
            in_specs=[x_spec, w_spec, b_spec],
            out_specs=(y_spec, stat_spec),
            compiler_params=cparams,
            cost_estimate=conv_cost,
        )(x_tiles, w9, bias_p)

        # Tiny O(C) reduction + BN scale/shift math in XLA (single pass stats).
        s = jnp.sum(stats[:, 0, :Cout], axis=0)
        ss = jnp.sum(stats[:, 1, :Cout], axis=0)
        count = float(N * HW)
        mean = s / count
        var = jnp.maximum(ss / count - mean * mean, 0.0)
        scale = gamma.astype(jnp.float32) * lax.rsqrt(var + BN_EPS)
        shift = beta.astype(jnp.float32) - mean * scale
        scale2 = scale.reshape(Cout, 1)
        shift2 = shift.reshape(Cout, 1)

        out = pl.pallas_call(
            _bn_relu_kernel,
            out_shape=jax.ShapeDtypeStruct((N, Cout, HW), jnp.float32),
            grid=grid,
            in_specs=[y_spec,
                      pl.BlockSpec((Cout, 1), lambda n, t: (0, 0)),
                      pl.BlockSpec((Cout, 1), lambda n, t: (0, 0))],
            out_specs=pl.BlockSpec((1, Cout, L), lambda n, t: (n, 0, t)),
            compiler_params=pltpu.CompilerParams(
                dimension_semantics=("parallel", "parallel"),
                vmem_limit_bytes=vmem_limit),
        )(y, scale2, shift2)
    else:
        out = pl.pallas_call(
            conv_kernel,
            out_shape=jax.ShapeDtypeStruct((N, Cout, HW), jnp.float32),
            grid=grid,
            in_specs=[x_spec, w_spec, b_spec],
            out_specs=y_spec,
            compiler_params=cparams,
            cost_estimate=conv_cost,
        )(x_tiles, w9, bias_p)

    # Output is already NCHW-flat; this reshape is free (no transpose pass).
    return out.reshape(N, Cout, H, W)


# ---------------------------------------------------------------------------
# Pure-JAX reference (sanity check only)
# ---------------------------------------------------------------------------
def conv_block_ref(x_nchw, weight_oihw, bias, gamma, beta, act=True):
    y = lax.conv_general_dilated(
        x_nchw, weight_oihw, window_strides=(1, 1), padding="SAME",
        dimension_numbers=("NCHW", "OIHW", "NCHW"))
    y = y + bias[None, :, None, None]
    if act:
        mean = jnp.mean(y, axis=(0, 2, 3), keepdims=True)
        var = jnp.mean((y - mean) ** 2, axis=(0, 2, 3), keepdims=True)
        y = (y - mean) * lax.rsqrt(var + BN_EPS)
        y = y * gamma[None, :, None, None] + beta[None, :, None, None]
        y = jnp.maximum(y, 0.0)
    return y


if __name__ == "__main__":
    # Small shapes consistent with conv_block(in_c=4, out_c=8)
    N, Cin, H, W = 2, 4, 16, 16
    Cout = 8

    key = jax.random.PRNGKey(0)
    kx, kw, kb = jax.random.split(key, 3)

    x = jax.random.normal(kx, (N, Cin, H, W), dtype=jnp.float32)
    weight = jax.random.normal(kw, (Cout, Cin, 3, 3), dtype=jnp.float32) * 0.1
    bias = jax.random.normal(kb, (Cout,), dtype=jnp.float32) * 0.1
    gamma = jnp.ones((Cout,), dtype=jnp.float32)   # BatchNorm default init
    beta = jnp.zeros((Cout,), dtype=jnp.float32)

    ref = conv_block_ref(x, weight, bias, gamma, beta, act=True)
    ref_nc = conv_block_ref(x, weight, bias, gamma, beta, act=False)

    # act=True, f32 matmul (exact check), auto row tiling (single tile here).
    out_f32 = jax.block_until_ready(
        conv_block_forward(x, weight, bias, gamma, beta, act=True,
                           compute_dtype=jnp.float32))
    assert out_f32.shape == (N, Cout, H, W)
    assert jnp.max(jnp.abs(out_f32 - ref)) < 2e-4, "f32 act=True mismatch"

    # act=True, f32, explicit 2 row tiles (exercises the halo'd multi-tile grid).
    out_rt = jax.block_until_ready(
        conv_block_forward(x, weight, bias, gamma, beta, act=True,
                           compute_dtype=jnp.float32, row_tiles=2))
    assert jnp.max(jnp.abs(out_rt - ref)) < 2e-4, "row-tiled act=True mismatch"

    # act=True, bf16 matmul inputs + bf16 intermediate (fast path), loose tol.
    out_bf16 = jax.block_until_ready(
        conv_block_forward(x, weight, bias, gamma, beta, act=True,
                           compute_dtype=jnp.bfloat16))
    assert jnp.max(jnp.abs(out_bf16 - ref)) < 8e-2, "bf16 act=True mismatch"

    # act=False path (conv + bias only), f32 exact check.
    out_nc = jax.block_until_ready(
        conv_block_forward(x, weight, bias, gamma, beta, act=False,
                           compute_dtype=jnp.float32))
    assert jnp.max(jnp.abs(out_nc - ref_nc)) < 2e-4, "act=False mismatch"

    print("KERNEL_OK")
</pallas_src>

<mosaic_0001>
module attributes {stable_mosaic.version = 11 : i64} {
  func.func @_conv_kernel(%arg0: i32, %arg1: i32, %arg2: memref<1x18x18x8xf32, #tpu.memory_space<vmem>>, %arg3: memref<9x8x128xf32, #tpu.memory_space<vmem>>, %arg4: memref<1x128xf32, #tpu.memory_space<vmem>>, %arg5: memref<1x8x256xf32, #tpu.memory_space<vmem>>, %arg6: memref<1x2x128xf32, #tpu.memory_space<vmem>>) attributes {dimension_semantics = [#tpu.dimension_semantics<parallel>, #tpu.dimension_semantics<parallel>], iteration_bounds = array<i64: 2, 1>, scalar_prefetch = 0 : i64, scratch_operands = 0 : i64, tpu.core_type = #tpu.core_type<tc>, window_params = [{transform_indices = @transform_0, window_bounds = array<i64: 1, 18, 18, 8>}, {pipeline_mode = #tpu.pipeline_mode<synchronous>, transform_indices = @transform_1, window_bounds = array<i64: 9, 8, 128>}, {pipeline_mode = #tpu.pipeline_mode<synchronous>, transform_indices = @transform_2, window_bounds = array<i64: 1, 128>}, {transform_indices = @transform_3, window_bounds = array<i64: 1, 8, 256>}, {transform_indices = @transform_4, window_bounds = array<i64: 1, 2, 128>}]} {
    %c0 = arith.constant 0 : index
    %c0_0 = arith.constant 0 : index
    %c0_1 = arith.constant 0 : index
    %c0_2 = arith.constant 0 : index
    %0 = vector.load %arg2[%c0, %c0_0, %c0_1, %c0_2] : memref<1x18x18x8xf32, #tpu.memory_space<vmem>>, vector<1x16x16x8xf32>
    %1 = vector.shape_cast %0 : vector<1x16x16x8xf32> to vector<16x16x8xf32>
    %2 = vector.shape_cast %1 : vector<16x16x8xf32> to vector<256x8xf32>
    %c0_3 = arith.constant 0 : index
    %c0_4 = arith.constant 0 : index
    %c0_5 = arith.constant 0 : index
    %3 = vector.load %arg3[%c0_3, %c0_4, %c0_5] : memref<9x8x128xf32, #tpu.memory_space<vmem>>, vector<1x8x128xf32>
    %4 = vector.shape_cast %3 : vector<1x8x128xf32> to vector<8x128xf32>
    %cst = arith.constant dense<0.000000e+00> : vector<256x128xf32>
    %5 = tpu.matmul %2, %4, %cst {dimension_numbers = #tpu.dot_dimension_numbers<[1], [0], [0], [1], [0, 0, 1, 1], [], []>} : vector<256x8xf32>, vector<8x128xf32>, vector<256x128xf32> -> vector<256x128xf32>
    %c0_6 = arith.constant 0 : index
    %c0_7 = arith.constant 0 : index
    %c1 = arith.constant 1 : index
    %c0_8 = arith.constant 0 : index
    %6 = vector.load %arg2[%c0_6, %c0_7, %c1, %c0_8] : memref<1x18x18x8xf32, #tpu.memory_space<vmem>>, vector<1x16x16x8xf32>
    %7 = vector.shape_cast %6 : vector<1x16x16x8xf32> to vector<16x16x8xf32>
    %8 = vector.shape_cast %7 : vector<16x16x8xf32> to vector<256x8xf32>
    %c1_9 = arith.constant 1 : index
    %c0_10 = arith.constant 0 : index
    %c0_11 = arith.constant 0 : index
    %9 = vector.load %arg3[%c1_9, %c0_10, %c0_11] : memref<9x8x128xf32, #tpu.memory_space<vmem>>, vector<1x8x128xf32>
    %10 = vector.shape_cast %9 : vector<1x8x128xf32> to vector<8x128xf32>
    %cst_12 = arith.constant dense<0.000000e+00> : vector<256x128xf32>
    %11 = tpu.matmul %8, %10, %cst_12 {dimension_numbers = #tpu.dot_dimension_numbers<[1], [0], [0], [1], [0, 0, 1, 1], [], []>} : vector<256x8xf32>, vector<8x128xf32>, vector<256x128xf32> -> vector<256x128xf32>
    %12 = arith.addf %5, %11 : vector<256x128xf32>
    %c0_13 = arith.constant 0 : index
    %c0_14 = arith.constant 0 : index
    %c2 = arith.constant 2 : index
    %c0_15 = arith.constant 0 : index
    %13 = vector.load %arg2[%c0_13, %c0_14, %c2, %c0_15] : memref<1x18x18x8xf32, #tpu.memory_space<vmem>>, vector<1x16x16x8xf32>
    %14 = vector.shape_cast %13 : vector<1x16x16x8xf32> to vector<16x16x8xf32>
    %15 = vector.shape_cast %14 : vector<16x16x8xf32> to vector<256x8xf32>
    %c2_16 = arith.constant 2 : index
    %c0_17 = arith.constant 0 : index
    %c0_18 = arith.constant 0 : index
    %16 = vector.load %arg3[%c2_16, %c0_17, %c0_18] : memref<9x8x128xf32, #tpu.memory_space<vmem>>, vector<1x8x128xf32>
    %17 = vector.shape_cast %16 : vector<1x8x128xf32> to vector<8x128xf32>
    %cst_19 = arith.constant dense<0.000000e+00> : vector<256x128xf32>
    %18 = tpu.matmul %15, %17, %cst_19 {dimension_numbers = #tpu.dot_dimension_numbers<[1], [0], [0], [1], [0, 0, 1, 1], [], []>} : vector<256x8xf32>, vector<8x128xf32>, vector<256x128xf32> -> vector<256x128xf32>
    %19 = arith.addf %12, %18 : vector<256x128xf32>
    %c0_20 = arith.constant 0 : index
    %c1_21 = arith.constant 1 : index
    %c0_22 = arith.constant 0 : index
    %c0_23 = arith.constant 0 : index
    %20 = vector.load %arg2[%c0_20, %c1_21, %c0_22, %c0_23] : memref<1x18x18x8xf32, #tpu.memory_space<vmem>>, vector<1x16x16x8xf32>
    %21 = vector.shape_cast %20 : vector<1x16x16x8xf32> to vector<16x16x8xf32>
    %22 = vector.shape_cast %21 : vector<16x16x8xf32> to vector<256x8xf32>
    %c3 = arith.constant 3 : index
    %c0_24 = arith.constant 0 : index
    %c0_25 = arith.constant 0 : index
    %23 = vector.load %arg3[%c3, %c0_24, %c0_25] : memref<9x8x128xf32, #tpu.memory_space<vmem>>, vector<1x8x128xf32>
    %24 = vector.shape_cast %23 : vector<1x8x128xf32> to vector<8x128xf32>
    %cst_26 = arith.constant dense<0.000000e+00> : vector<256x128xf32>
    %25 = tpu.matmul %22, %24, %cst_26 {dimension_numbers = #tpu.dot_dimension_numbers<[1], [0], [0], [1], [0, 0, 1, 1], [], []>} : vector<256x8xf32>, vector<8x128xf32>, vector<256x128xf32> -> vector<256x128xf32>
    %26 = arith.addf %19, %25 : vector<256x128xf32>
    %c0_27 = arith.constant 0 : index
    %c1_28 = arith.constant 1 : index
    %c1_29 = arith.constant 1 : index
    %c0_30 = arith.constant 0 : index
    %27 = vector.load %arg2[%c0_27, %c1_28, %c1_29, %c0_30] : memref<1x18x18x8xf32, #tpu.memory_space<vmem>>, vector<1x16x16x8xf32>
    %28 = vector.shape_cast %27 : vector<1x16x16x8xf32> to vector<16x16x8xf32>
    %29 = vector.shape_cast %28 : vector<16x16x8xf32> to vector<256x8xf32>
    %c4 = arith.constant 4 : index
    %c0_31 = arith.constant 0 : index
    %c0_32 = arith.constant 0 : index
    %30 = vector.load %arg3[%c4, %c0_31, %c0_32] : memref<9x8x128xf32, #tpu.memory_space<vmem>>, vector<1x8x128xf32>
    %31 = vector.shape_cast %30 : vector<1x8x128xf32> to vector<8x128xf32>
    %cst_33 = arith.constant dense<0.000000e+00> : vector<256x128xf32>
    %32 = tpu.matmul %29, %31, %cst_33 {dimension_numbers = #tpu.dot_dimension_numbers<[1], [0], [0], [1], [0, 0, 1, 1], [], []>} : vector<256x8xf32>, vector<8x128xf32>, vector<256x128xf32> -> vector<256x128xf32>
    %33 = arith.addf %26, %32 : vector<256x128xf32>
    %c0_34 = arith.constant 0 : index
    %c1_35 = arith.constant 1 : index
    %c2_36 = arith.constant 2 : index
    %c0_37 = arith.constant 0 : index
    %34 = vector.load %arg2[%c0_34, %c1_35, %c2_36, %c0_37] : memref<1x18x18x8xf32, #tpu.memory_space<vmem>>, vector<1x16x16x8xf32>
    %35 = vector.shape_cast %34 : vector<1x16x16x8xf32> to vector<16x16x8xf32>
    %36 = vector.shape_cast %35 : vector<16x16x8xf32> to vector<256x8xf32>
    %c5 = arith.constant 5 : index
    %c0_38 = arith.constant 0 : index
    %c0_39 = arith.constant 0 : index
    %37 = vector.load %arg3[%c5, %c0_38, %c0_39] : memref<9x8x128xf32, #tpu.memory_space<vmem>>, vector<1x8x128xf32>
    %38 = vector.shape_cast %37 : vector<1x8x128xf32> to vector<8x128xf32>
    %cst_40 = arith.constant dense<0.000000e+00> : vector<256x128xf32>
    %39 = tpu.matmul %36, %38, %cst_40 {dimension_numbers = #tpu.dot_dimension_numbers<[1], [0], [0], [1], [0, 0, 1, 1], [], []>} : vector<256x8xf32>, vector<8x128xf32>, vector<256x128xf32> -> vector<256x128xf32>
    %40 = arith.addf %33, %39 : vector<256x128xf32>
    %c0_41 = arith.constant 0 : index
    %c2_42 = arith.constant 2 : index
    %c0_43 = arith.constant 0 : index
    %c0_44 = arith.constant 0 : index
    %41 = vector.load %arg2[%c0_41, %c2_42, %c0_43, %c0_44] : memref<1x18x18x8xf32, #tpu.memory_space<vmem>>, vector<1x16x16x8xf32>
    %42 = vector.shape_cast %41 : vector<1x16x16x8xf32> to vector<16x16x8xf32>
    %43 = vector.shape_cast %42 : vector<16x16x8xf32> to vector<256x8xf32>
    %c6 = arith.constant 6 : index
    %c0_45 = arith.constant 0 : index
    %c0_46 = arith.constant 0 : index
    %44 = vector.load %arg3[%c6, %c0_45, %c0_46] : memref<9x8x128xf32, #tpu.memory_space<vmem>>, vector<1x8x128xf32>
    %45 = vector.shape_cast %44 : vector<1x8x128xf32> to vector<8x128xf32>
    %cst_47 = arith.constant dense<0.000000e+00> : vector<256x128xf32>
    %46 = tpu.matmul %43, %45, %cst_47 {dimension_numbers = #tpu.dot_dimension_numbers<[1], [0], [0], [1], [0, 0, 1, 1], [], []>} : vector<256x8xf32>, vector<8x128xf32>, vector<256x128xf32> -> vector<256x128xf32>
    %47 = arith.addf %40, %46 : vector<256x128xf32>
    %c0_48 = arith.constant 0 : index
    %c2_49 = arith.constant 2 : index
    %c1_50 = arith.constant 1 : index
    %c0_51 = arith.constant 0 : index
    %48 = vector.load %arg2[%c0_48, %c2_49, %c1_50, %c0_51] : memref<1x18x18x8xf32, #tpu.memory_space<vmem>>, vector<1x16x16x8xf32>
    %49 = vector.shape_cast %48 : vector<1x16x16x8xf32> to vector<16x16x8xf32>
    %50 = vector.shape_cast %49 : vector<16x16x8xf32> to vector<256x8xf32>
    %c7 = arith.constant 7 : index
    %c0_52 = arith.constant 0 : index
    %c0_53 = arith.constant 0 : index
    %51 = vector.load %arg3[%c7, %c0_52, %c0_53] : memref<9x8x128xf32, #tpu.memory_space<vmem>>, vector<1x8x128xf32>
    %52 = vector.shape_cast %51 : vector<1x8x128xf32> to vector<8x128xf32>
    %cst_54 = arith.constant dense<0.000000e+00> : vector<256x128xf32>
    %53 = tpu.matmul %50, %52, %cst_54 {dimension_numbers = #tpu.dot_dimension_numbers<[1], [0], [0], [1], [0, 0, 1, 1], [], []>} : vector<256x8xf32>, vector<8x128xf32>, vector<256x128xf32> -> vector<256x128xf32>
    %54 = arith.addf %47, %53 : vector<256x128xf32>
    %c0_55 = arith.constant 0 : index
    %c2_56 = arith.constant 2 : index
    %c2_57 = arith.constant 2 : index
    %c0_58 = arith.constant 0 : index
    %55 = vector.load %arg2[%c0_55, %c2_56, %c2_57, %c0_58] : memref<1x18x18x8xf32, #tpu.memory_space<vmem>>, vector<1x16x16x8xf32>
    %56 = vector.shape_cast %55 : vector<1x16x16x8xf32> to vector<16x16x8xf32>
    %57 = vector.shape_cast %56 : vector<16x16x8xf32> to vector<256x8xf32>
    %c8 = arith.constant 8 : index
    %c0_59 = arith.constant 0 : index
    %c0_60 = arith.constant 0 : index
    %58 = vector.load %arg3[%c8, %c0_59, %c0_60] : memref<9x8x128xf32, #tpu.memory_space<vmem>>, vector<1x8x128xf32>
    %59 = vector.shape_cast %58 : vector<1x8x128xf32> to vector<8x128xf32>
    %cst_61 = arith.constant dense<0.000000e+00> : vector<256x128xf32>
    %60 = tpu.matmul %57, %59, %cst_61 {dimension_numbers = #tpu.dot_dimension_numbers<[1], [0], [0], [1], [0, 0, 1, 1], [], []>} : vector<256x8xf32>, vector<8x128xf32>, vector<256x128xf32> -> vector<256x128xf32>
    %61 = arith.addf %54, %60 : vector<256x128xf32>
    %c0_62 = arith.constant 0 : index
    %c0_63 = arith.constant 0 : index
    %62 = vector.load %arg4[%c0_62, %c0_63] : memref<1x128xf32, #tpu.memory_space<vmem>>, vector<1x128xf32>
    %63 = vector.broadcast %62 : vector<1x128xf32> to vector<256x128xf32>
    %64 = arith.addf %61, %63 : vector<256x128xf32>
    %cst_64 = arith.constant dense<0.000000e+00> : vector<128xf32>
    %65 = vector.multi_reduction <add>, %64, %cst_64 [0] : vector<256x128xf32> to vector<128xf32>
    %66 = vector.shape_cast %65 : vector<128xf32> to vector<1x128xf32>
    %67 = arith.mulf %64, %64 : vector<256x128xf32>
    %cst_65 = arith.constant dense<0.000000e+00> : vector<128xf32>
    %68 = vector.multi_reduction <add>, %67, %cst_65 [0] : vector<256x128xf32> to vector<128xf32>
    %69 = vector.shape_cast %68 : vector<128xf32> to vector<1x128xf32>
    %70 = tpu.concatenate %66, %69 in 0 : vector<1x128xf32>, vector<1x128xf32> -> vector<2x128xf32>
    %c0_66 = arith.constant 0 : index
    %c0_67 = arith.constant 0 : index
    %c0_68 = arith.constant 0 : index
    %71 = vector.load %arg6[%c0_66, %c0_67, %c0_68] : memref<1x2x128xf32, #tpu.memory_space<vmem>>, vector<1x2x128xf32>
    %72 = vector.shape_cast %71 : vector<1x2x128xf32> to vector<2x128xf32>
    %73 = vector.shape_cast %70 : vector<2x128xf32> to vector<1x2x128xf32>
    tpu.vector_store %arg6[%c0_66, %c0_67, %c0_68], %73 {strides = array<i32>} : memref<1x2x128xf32, #tpu.memory_space<vmem>>, vector<1x2x128xf32>,
    %74 = tpu.transpose %64, [1, 0] : vector<256x128xf32> -> vector<128x256xf32>
    %75 = vector.extract_strided_slice %74 {offsets = [0, 0], sizes = [8, 256], strides = [1, 1]} : vector<128x256xf32> to vector<8x256xf32>
    %c0_69 = arith.constant 0 : index
    %c0_70 = arith.constant 0 : index
    %c0_71 = arith.constant 0 : index
    %76 = vector.load %arg5[%c0_69, %c0_70, %c0_71] : memref<1x8x256xf32, #tpu.memory_space<vmem>>, vector<1x8x256xf32>
    %77 = vector.shape_cast %76 : vector<1x8x256xf32> to vector<8x256xf32>
    %78 = vector.shape_cast %75 : vector<8x256xf32> to vector<1x8x256xf32>
    tpu.vector_store %arg5[%c0_69, %c0_70, %c0_71], %78 {strides = array<i32>} : memref<1x8x256xf32, #tpu.memory_space<vmem>>, vector<1x8x256xf32>,
    return
  }
  func.func @transform_0(%arg0: i32, %arg1: i32) -> (i32, i32, i32, i32) {
    %c1_i32 = arith.constant 1 : i32
    %0 = arith.muli %arg0, %c1_i32 : i32
    %1 = arith.addi %0, %arg1 : i32
    %c0_i32 = arith.constant 0 : i32
    %c0_i32_0 = arith.constant 0 : i32
    %c0_i32_1 = arith.constant 0 : i32
    %c0_i32_2 = arith.constant 0 : i32
    return %1, %c0_i32, %c0_i32_0, %c0_i32_1 : i32, i32, i32, i32
  }
  func.func @transform_1(%arg0: i32, %arg1: i32) -> (i32, i32, i32) {
    %c0_i32 = arith.constant 0 : i32
    %c0_i32_0 = arith.constant 0 : i32
    %c0_i32_1 = arith.constant 0 : i32
    %c0_i32_2 = arith.constant 0 : i32
    return %c0_i32, %c0_i32_0, %c0_i32_1 : i32, i32, i32
  }
  func.func @transform_2(%arg0: i32, %arg1: i32) -> (i32, i32) {
    %c0_i32 = arith.constant 0 : i32
    %c0_i32_0 = arith.constant 0 : i32
    %c0_i32_1 = arith.constant 0 : i32
    return %c0_i32, %c0_i32_0 : i32, i32
  }
  func.func @transform_3(%arg0: i32, %arg1: i32) -> (i32, i32, i32) {
    %c0_i32 = arith.constant 0 : i32
    %c0_i32_0 = arith.constant 0 : i32
    return %arg0, %c0_i32, %arg1 : i32, i32, i32
  }
  func.func @transform_4(%arg0: i32, %arg1: i32) -> (i32, i32, i32) {
    %c1_i32 = arith.constant 1 : i32
    %0 = arith.muli %arg0, %c1_i32 : i32
    %1 = arith.addi %0, %arg1 : i32
    %c0_i32 = arith.constant 0 : i32
    %c0_i32_0 = arith.constant 0 : i32
    %c0_i32_1 = arith.constant 0 : i32
    return %1, %c0_i32, %c0_i32_0 : i32, i32, i32
  }
}

</mosaic_0001>

<llo_original>
// kernel: tpu_custom_call.1
$region0: #{tpu_custom_call.1}
  #allocation0 [shape = 'u32[]', space=smem, size = 0x4, offset = 0x4, fixed_abs, tag = 'smem constant byte address 0x4 - core index']
  #allocation1 [shape = 'u32[72,128]{1,0:T(1,128)}', space=vmem, size = 0x9000, scoped, tag = 'internal scratch']
  %s0 = inlined_call_operand.vmem [shape: f32[2,18,18,8], index: 0, kind: input, shape index: {}]
  %s1 = inlined_call_operand.vmem [shape: f32[9,8,128], index: 1, kind: input, shape index: {}]
  %s2 = inlined_call_operand.vmem [shape: f32[1,128], index: 2, kind: input, shape index: {}]
  %s3 = inlined_call_operand.hbm [shape: f32[2,8,256], index: 3, kind: output, shape index: {0}]
  %s4 = inlined_call_operand.hbm [shape: f32[2,2,128], index: 4, kind: output, shape index: {1}]
  %5 = xla_tuple %s3, %s4
  %s6 = sld [smem:[#allocation0]]
  $region53: #{tpu_custom_call.1} parent=0
    _
  %s8 = ssub.s32 1, %s6
  %s9 = scalar_select 0, %s8, %s6
  $region1: #{tpu_custom_call.1} parent=0
    #allocation2 [shape = 'u8[16384]{0}', space=vmem, size = 0x4000, scoped, tag = 'output window, operand 0']
    #allocation3 [shape = 's32[2]{0}', space=sflag, size = 0x8, scoped, tag = 'scoped memory for tpu_custom_call.1']
    #allocation4 [shape = 'u8[2048]{0}', space=vmem, size = 0x800, scoped, tag = 'output window, operand 1']
    #allocation5 [shape = 's32[2]{0}', space=sflag, size = 0x8, scoped, tag = 'scoped memory for tpu_custom_call.1']
    %10 = vsyncpa [#allocation3], 0
    %s11 = scalar_lea.sflag [#allocation3], 1
    %12 = vsyncpa %s11, 0
    %13 = vsyncpa [#allocation5], 0
    %s14 = scalar_lea.sflag [#allocation5], 1
    %15 = vsyncpa %s14, 0
    loop: start=0, step=1, limit=4
    $region2: #{tpu_custom_call.1} parent=1 // loop_pre_header
      _
    $region3: #{tpu_custom_call.1} parent=1 // loop_header
      %s17 = sphi 0, %s21
      %p18 = scmp.ge.s32.totalorder %s17, 4
      %s24 = sphi 0, %s36
      %s25 = sphi 0, %s32
      %s26 = sphi 0, %s24
      %s27 = sphi 0, %s25
      %s28 = sphi 0, %s26
      %s29 = sphi 0, %s27
      %s41 = sphi 0, %s43
      %s44 = sphi 0, %s41
      %s45 = sphi 0, %s44
      %s61 = sphi 0, %s45
      %s65 = sphi 0, %s65
      %s67 = sphi 0, %s65
      %s68 = sphi 0, %s67
      %s82 = sphi 0, %s68
      %s86 = sphi 0, %s86
      %s88 = sphi 0, %s86
      %s89 = sphi 0, %s88
      %s103 = sphi 0, %s89
      %s111 = sphi 0, %s113
      %s114 = sphi 0, %s111
      %s115 = sphi 0, %s114
      %s131 = sphi 0, %s115
      %s139 = sphi 0, %s141
      %s142 = sphi 0, %s139
      %s143 = sphi 0, %s142
      %s159 = sphi 0, %s143
    $region4: #{tpu_custom_call.1} parent=1 // loop_header_branch
      %20 = sbr.rel (%p18) target = $region8
    $region5: #{tpu_custom_call.1} parent=1 // loop_body
      %s22 = ssub.s32 %s17, 1
      %s23 = ssub.s32 %s17, 2
      %s30 = sadd.s32 1, %s25
      %p31 = scmp.ge.s32.totalorder %s30, 1
      %s32 = scalar_select %p31, 0, %s30
      %s33 = sadd.s32 1, %s24
      %s34 = scalar_select %p31, %s33, %s24
      %p35 = scmp.ge.s32.totalorder %s34, 2
      %s36 = scalar_select %p35, 0, %s34
      %s37 = sadd.s32 %s24, %s25
      %s38 = sadd.s32 %s36, %s32
      %s39 = ssub.s32 %s37, %s38
      %p40 = scmp.eq.s32.totalorder %s39, 0
      %s42 = sadd.s32 %s41, 1
      %s43 = scalar_select %p40, %s41, %s42
      %p46 = pneg %p40
      %p47 = scmp.eq.s32.totalorder %s17, 1
      %p48 = por %p46, %p47
      %p49 = scmp.ne.s32.totalorder %s41, %s44
      %p50 = scmp.eq.s32.totalorder %s17, 0
      %p51 = por %p49, %p50
      %p52 = scmp.ne.s32.totalorder %s41, %s44
      %p53 = scmp.eq.s32.totalorder %s22, 1
      %p54 = por %p52, %p53
      %p55 = scmp.ne.s32.totalorder %s44, %s45
      %p56 = scmp.eq.s32.totalorder %s22, 0
      %p57 = por %p55, %p56
      %p58 = scmp.ne.s32.totalorder %s44, %s45
      %p59 = scmp.eq.s32.totalorder %s23, 1
      %p60 = por %p58, %p59
      %p62 = scmp.ne.s32.totalorder %s45, %s61
      %p63 = scmp.eq.s32.totalorder %s23, 0
      %p64 = por %p62, %p63
      %s66 = sadd.s32 %s65, 1
      %p69 = scmp.eq.s32.totalorder %s17, 1
      %p70 = scmp.ne.s32.totalorder %s65, %s67
      %p71 = scmp.eq.s32.totalorder %s17, 0
      %p72 = por %p70, %p71
      %p73 = scmp.ne.s32.totalorder %s65, %s67
      %p74 = scmp.eq.s32.totalorder %s22, 1
      %p75 = por %p73, %p74
      %p76 = scmp.ne.s32.totalorder %s67, %s68
      %p77 = scmp.eq.s32.totalorder %s22, 0
      %p78 = por %p76, %p77
      %p79 = scmp.ne.s32.totalorder %s67, %s68
      %p80 = scmp.eq.s32.totalorder %s23, 1
      %p81 = por %p79, %p80
      %p83 = scmp.ne.s32.totalorder %s68, %s82
      %p84 = scmp.eq.s32.totalorder %s23, 0
      %p85 = por %p83, %p84
      %s87 = sadd.s32 %s86, 1
      %p90 = scmp.eq.s32.totalorder %s17, 1
      %p91 = scmp.ne.s32.totalorder %s86, %s88
      %p92 = scmp.eq.s32.totalorder %s17, 0
      %p93 = por %p91, %p92
      %p94 = scmp.ne.s32.totalorder %s86, %s88
      %p95 = scmp.eq.s32.totalorder %s22, 1
      %p96 = por %p94, %p95
      %p97 = scmp.ne.s32.totalorder %s88, %s89
      %p98 = scmp.eq.s32.totalorder %s22, 0
      %p99 = por %p97, %p98
      %p100 = scmp.ne.s32.totalorder %s88, %s89
      %p101 = scmp.eq.s32.totalorder %s23, 1
      %p102 = por %p100, %p101
      %p104 = scmp.ne.s32.totalorder %s89, %s103
      %p105 = scmp.eq.s32.totalorder %s23, 0
      %p106 = por %p104, %p105
      %s107 = ssub.s32 %s24, %s36
      %s108 = ssub.s32 %s25, %s32
      %s109 = sor.u32 %s107, %s108
      %p110 = scmp.eq.s32.totalorder %s109, 0
      %s112 = sadd.s32 %s111, 1
      %s113 = scalar_select %p110, %s111, %s112
      %p116 = pneg %p110
      %p117 = scmp.eq.s32.totalorder %s17, 1
      %p118 = por %p116, %p117
      %p119 = scmp.ne.s32.totalorder %s111, %s114
      %p120 = scmp.eq.s32.totalorder %s17, 0
      %p121 = por %p119, %p120
      %p122 = scmp.ne.s32.totalorder %s111, %s114
      %p123 = scmp.eq.s32.totalorder %s22, 1
      %p124 = por %p122, %p123
      %p125 = scmp.ne.s32.totalorder %s114, %s115
      %p126 = scmp.eq.s32.totalorder %s22, 0
      %p127 = por %p125, %p126
      %p128 = scmp.ne.s32.totalorder %s114, %s115
      %p129 = scmp.eq.s32.totalorder %s23, 1
      %p130 = por %p128, %p129
      %p132 = scmp.ne.s32.totalorder %s115, %s131
      %p133 = scmp.eq.s32.totalorder %s23, 0
      %p134 = por %p132, %p133
      %s135 = sadd.s32 %s24, %s25
      %s136 = sadd.s32 %s36, %s32
      %s137 = ssub.s32 %s135, %s136
      %p138 = scmp.eq.s32.totalorder %s137, 0
      %s140 = sadd.s32 %s139, 1
      %s141 = scalar_select %p138, %s139, %s140
      %p144 = pneg %p138
      %p145 = scmp.eq.s32.totalorder %s17, 1
      %p146 = por %p144, %p145
      %p147 = scmp.ne.s32.totalorder %s139, %s142
      %p148 = scmp.eq.s32.totalorder %s17, 0
      %p149 = por %p147, %p148
      %p150 = scmp.ne.s32.totalorder %s139, %s142
      %p151 = scmp.eq.s32.totalorder %s22, 1
      %p152 = por %p150, %p151
      %p153 = scmp.ne.s32.totalorder %s142, %s143
      %p154 = scmp.eq.s32.totalorder %s22, 0
      %p155 = por %p153, %p154
      %p156 = scmp.ne.s32.totalorder %s142, %s143
      %p157 = scmp.eq.s32.totalorder %s23, 1
      %p158 = por %p156, %p157
      %p160 = scmp.ne.s32.totalorder %s143, %s159
      %p161 = scmp.eq.s32.totalorder %s23, 0
      %p162 = por %p160, %p161
      %p163 = scmp.le.s32.totalorder 1, %s17
      %p164 = scmp.lt.s32.totalorder %s17, 3
      %p165 = pnand %p163, %p164
      %p166 = pneg %p165
      // Predicated region
      $region9: #{tpu_custom_call.1} parent=5 // pred_check
        _
      $region10: #{tpu_custom_call.1} parent=5 // pred_check_branch
        %168 = sbr.rel (%p165) target = $region12
      $region11: #{tpu_custom_call.1} parent=5 // pred_region
        %s169 = ssub.s32 %s17, 1
        // Predicated region
        $region13: #{tpu_custom_call.1} parent=11 // pred_check
          %p170 = pneg %p78
        $region14: #{tpu_custom_call.1} parent=11 // pred_check_branch
          %172 = sbr.rel (%p170) target = $region16
        $region15: #{tpu_custom_call.1} parent=11 // pred_region
          _
        $region16: #{tpu_custom_call.1} parent=11 // pred_fallthru
          _
        // Predicated region
        $region17: #{tpu_custom_call.1} parent=11 // pred_check
          %p173 = pneg %p99
        $region18: #{tpu_custom_call.1} parent=11 // pred_check_branch
          %175 = sbr.rel (%p173) target = $region20
        $region19: #{tpu_custom_call.1} parent=11 // pred_region
          _
        $region20: #{tpu_custom_call.1} parent=11 // pred_fallthru
          _
      $region12: #{tpu_custom_call.1} parent=5 // pred_fallthru
        _
      %p176 = scmp.lt.s32.totalorder %s17, 2
      // Predicated region
      $region21: #{tpu_custom_call.1} parent=5 // pred_check
        %p177 = pneg %p176
      $region22: #{tpu_custom_call.1} parent=5 // pred_check_branch
        %179 = sbr.rel (%p177) target = $region24
      $region23: #{tpu_custom_call.1} parent=5 // pred_region
        // Predicated region
        $region25: #{tpu_custom_call.1} parent=23 // pred_check
          %p180 = pneg %p51
        $region26: #{tpu_custom_call.1} parent=23 // pred_check_branch
          %182 = sbr.rel (%p180) target = $region28
        $region27: #{tpu_custom_call.1} parent=23 // pred_region
          %s183 = sadd.s32 %s24, %s25
          %p184 = scmp.lt.s32.totalorder %s183, 1
          %s185 = scalar_select %p184, %s183, 1
          %s186 = smul.addr %s185, 54
          %s187 = smul.addr %s186, 8
          %s188 = scalar_lea.vmem %s0, %s187
          %s189 = sadd.s32 %s24, %s25
        $region28: #{tpu_custom_call.1} parent=23 // pred_fallthru
          _
      $region24: #{tpu_custom_call.1} parent=5 // pred_fallthru
        _
      %p190 = scmp.le.s32.totalorder 1, %s17
      %p191 = scmp.lt.s32.totalorder %s17, 3
      %p192 = pnand %p190, %p191
      %p193 = pneg %p192
      // Predicated region
      $region29: #{tpu_custom_call.1} parent=5 // pred_check
        _
      $region30: #{tpu_custom_call.1} parent=5 // pred_check_branch
        %195 = sbr.rel (%p192) target = $region32
      $region31: #{tpu_custom_call.1} parent=5 // pred_region
        %s196 = ssub.s32 %s17, 1
        %s197 = sadd.s32 %s26, %s27
        %p198 = scmp.lt.s32.totalorder %s197, 1
        %s199 = scalar_select %p198, %s197, 1
        %s200 = smul.addr %s199, 54
        %s201 = smul.addr %s200, 8
        %s202 = scalar_lea.vmem %s0, %s201
        %p203 = pneg %p57
        %p204 = pneg %p54
        %p205 = pneg %p78
        %p206 = pneg %p75
        %p207 = pneg %p99
        %p208 = pneg %p96
        %p209 = pneg %p127
        %p210 = pneg %p124
        %s211 = sand.u32 %s114, 1
        %s212 = scalar_lea.sflag [#allocation3], %s211
        %s213 = sand.u32 %s114, 1
        %s214 = smul.addr %s213, 16
        %s215 = scalar_lea.vmem [#allocation2], %s214
        %p216 = pneg %p155
        %p217 = pneg %p152
        %s218 = sand.u32 %s142, 1
        %s219 = scalar_lea.sflag [#allocation5], %s218
        %s220 = sand.u32 %s142, 1
        %s221 = smul.addr %s220, 2
        %s222 = scalar_lea.vmem [#allocation4], %s221
        %s223 = sadd.s32 %s26, %s27
        %p224 = scmp.lt.s32.totalorder %s223, 1
        %s225 = scalar_select %p224, %s223, 1
        %s226 = smul.addr %s225, 54
        %s227 = smul.addr %s226, 8
        %s228 = scalar_lea.vmem %s0, %s227
        %s229 = sadd.s32 %s26, %s27
        %s230 = smul.u32 2, %s27
        %s231 = sadd.s32 %s26, %s27
        %v232 = vld [vmem:[%s228] sm:$0xff]
        %v233 = vld [vmem:[%s228 + $0x8] sm:$0xff]
        %v234 = vld [vmem:[%s228 + $0x18] sm:$0xff]
        %v235 = vld [vmem:[%s228 + $0x20] sm:$0xff]
        %v236 = vld [vmem:[%s228 + $0x30] sm:$0xff]
        %v237 = vld [vmem:[%s228 + $0x38] sm:$0xff]
        %v238 = vld [vmem:[%s228 + $0x48] sm:$0xff]
        %v239 = vld [vmem:[%s228 + $0x50] sm:$0xff]
        %v240 = vld [vmem:[%s228 + $0x60] sm:$0xff]
        %v241 = vld [vmem:[%s228 + $0x68] sm:$0xff]
        %v242 = vld [vmem:[%s228 + $0x78] sm:$0xff]
        %v243 = vld [vmem:[%s228 + $0x80] sm:$0xff]
        %v244 = vld [vmem:[%s228 + $0x90] sm:$0xff]
        %v245 = vld [vmem:[%s228 + $0x98] sm:$0xff]
        %v246 = vld [vmem:[%s228 + $0xa8] sm:$0xff]
        %v247 = vld [vmem:[%s228 + $0xb0] sm:$0xff]
        %v248 = vld [vmem:[%s228 + $0xc0] sm:$0xff]
        %v249 = vld [vmem:[%s228 + $0xc8] sm:$0xff]
        %v250 = vld [vmem:[%s228 + $0xd8] sm:$0xff]
        %v251 = vld [vmem:[%s228 + $0xe0] sm:$0xff]
        %v252 = vld [vmem:[%s228 + $0xf0] sm:$0xff]
        %v253 = vld [vmem:[%s228 + $0xf8] sm:$0xff]
        %v254 = vld [vmem:[%s228 + $0x108] sm:$0xff]
        %v255 = vld [vmem:[%s228 + $0x110] sm:$0xff]
        %v256 = vld [vmem:[%s228 + $0x120] sm:$0xff]
        %v257 = vld [vmem:[%s228 + $0x128] sm:$0xff]
        %v258 = vld [vmem:[%s228 + $0x138] sm:$0xff]
        %v259 = vld [vmem:[%s228 + $0x140] sm:$0xff]
        %v260 = vld [vmem:[%s228 + $0x150] sm:$0xff]
        %v261 = vld [vmem:[%s228 + $0x158] sm:$0xff]
        %v262 = vld [vmem:[%s228 + $0x168] sm:$0xff]
        %v263 = vld [vmem:[%s228 + $0x170] sm:$0xff]
        %v264 = vld [vmem:[%s1] sm:$0xff]
        %v265 = vld [vmem:[%s228 + $0x1] sm:$0xff]
        %v266 = vld [vmem:[%s228 + $0x9] sm:$0xff]
        %v267 = vld [vmem:[%s228 + $0x19] sm:$0xff]
        %v268 = vld [vmem:[%s228 + $0x21] sm:$0xff]
        %v269 = vld [vmem:[%s228 + $0x31] sm:$0xff]
        %v270 = vld [vmem:[%s228 + $0x39] sm:$0xff]
        %v271 = vld [vmem:[%s228 + $0x49] sm:$0xff]
        %v272 = vld [vmem:[%s228 + $0x51] sm:$0xff]
        %v273 = vld [vmem:[%s228 + $0x61] sm:$0xff]
        %v274 = vld [vmem:[%s228 + $0x69] sm:$0xff]
        %v275 = vld [vmem:[%s228 + $0x79] sm:$0xff]
        %v276 = vld [vmem:[%s228 + $0x81] sm:$0xff]
        %v277 = vld [vmem:[%s228 + $0x91] sm:$0xff]
        %v278 = vld [vmem:[%s228 + $0x99] sm:$0xff]
        %v279 = vld [vmem:[%s228 + $0xa9] sm:$0xff]
        %v280 = vld [vmem:[%s228 + $0xb1] sm:$0xff]
        %v281 = vld [vmem:[%s228 + $0xc1] sm:$0xff]
        %v282 = vld [vmem:[%s228 + $0xc9] sm:$0xff]
        %v283 = vld [vmem:[%s228 + $0xd9] sm:$0xff]
        %v284 = vld [vmem:[%s228 + $0xe1] sm:$0xff]
        %v285 = vld [vmem:[%s228 + $0xf1] sm:$0xff]
        %v286 = vld [vmem:[%s228 + $0xf9] sm:$0xff]
        %v287 = vld [vmem:[%s228 + $0x109] sm:$0xff]
        %v288 = vld [vmem:[%s228 + $0x111] sm:$0xff]
        %v289 = vld [vmem:[%s228 + $0x121] sm:$0xff]
        %v290 = vld [vmem:[%s228 + $0x129] sm:$0xff]
        %v291 = vld [vmem:[%s228 + $0x139] sm:$0xff]
        %v292 = vld [vmem:[%s228 + $0x141] sm:$0xff]
        %v293 = vld [vmem:[%s228 + $0x151] sm:$0xff]
        %v294 = vld [vmem:[%s228 + $0x159] sm:$0xff]
        %v295 = vld [vmem:[%s228 + $0x169] sm:$0xff]
        %v296 = vld [vmem:[%s228 + $0x171] sm:$0xff]
        %s297 = scalar_lea.vmem %s1, 8
        %v298 = vld [vmem:[%s297] sm:$0xff]
        %vm299 = vcmask 64512
        %v301 = vsel %vm299, %v265, 0
        %v304 = vsel %vm299, %v266, 0
        %v307 = vsel %vm299, %v267, 0
        %v310 = vsel %vm299, %v268, 0
        %v313 = vsel %vm299, %v269, 0
        %v316 = vsel %vm299, %v270, 0
        %v319 = vsel %vm299, %v271, 0
        %v322 = vsel %vm299, %v272, 0
        %v325 = vsel %vm299, %v273, 0
        %v328 = vsel %vm299, %v274, 0
        %v331 = vsel %vm299, %v275, 0
        %v334 = vsel %vm299, %v276, 0
        %v337 = vsel %vm299, %v277, 0
        %v340 = vsel %vm299, %v278, 0
        %v343 = vsel %vm299, %v279, 0
        %v346 = vsel %vm299, %v280, 0
        %v349 = vsel %vm299, %v281, 0
        %v352 = vsel %vm299, %v282, 0
        %v355 = vsel %vm299, %v283, 0
        %v358 = vsel %vm299, %v284, 0
        %v361 = vsel %vm299, %v285, 0
        %v364 = vsel %vm299, %v286, 0
        %v367 = vsel %vm299, %v287, 0
        %v370 = vsel %vm299, %v288, 0
        %v373 = vsel %vm299, %v289, 0
        %v376 = vsel %vm299, %v290, 0
        %v379 = vsel %vm299, %v291, 0
        %v382 = vsel %vm299, %v292, 0
        %v385 = vsel %vm299, %v293, 0
        %v388 = vsel %vm299, %v294, 0
        %v391 = vsel %vm299, %v295, 0
        %v394 = vsel %vm299, %v296, 0
        %396 = vmatpush.msra.mxu0 0.0
        %397 = vmatpush.msra.mxu0 0.0
        %398 = vmatpush.msra.mxu0 0.0
        %399 = vmatpush.msra.mxu0 0.0
        %400 = vmatpush.msra.mxu0 0.0
        %401 = vmatpush.msra.mxu0 0.0
        %402 = vmatpush.msra.mxu0 0.0
        %403 = vmatpush.msra.mxu0 0.0
        %404 = vmatpush.msra.mxu0 0.0
        %405 = vmatpush.msra.mxu0 0.0
        %406 = vmatpush.msra.mxu0 0.0
        %407 = vmatpush.msra.mxu0 0.0
        %408 = vmatpush.msra.mxu0 0.0
        %409 = vmatpush.msra.mxu0 0.0
        %410 = vmatpush.msra.mxu0 0.0
        %411 = vmatpush.msra.mxu0 %v298
        %412 = vmatmul.f32.gmra.mxu0 %v301
        %v413 = vpop.f32.mrf.mxu0
        %v414 = vadd.f32 0.0, %v413
        %415 = vmatmul.f32.gmra.mxu0 %v304
        %v416 = vpop.f32.mrf.mxu0
        %v417 = vadd.f32 0.0, %v416
        %418 = vmatmul.f32.gmra.mxu0 %v307
        %v419 = vpop.f32.mrf.mxu0
        %v420 = vadd.f32 0.0, %v419
        %421 = vmatmul.f32.gmra.mxu0 %v310
        %v422 = vpop.f32.mrf.mxu0
        %v423 = vadd.f32 0.0, %v422
        %424 = vmatmul.f32.gmra.mxu0 %v313
        %v425 = vpop.f32.mrf.mxu0
        %v426 = vadd.f32 0.0, %v425
        %427 = vmatmul.f32.gmra.mxu0 %v316
        %v428 = vpop.f32.mrf.mxu0
        %v429 = vadd.f32 0.0, %v428
        %430 = vmatmul.f32.gmra.mxu0 %v319
        %v431 = vpop.f32.mrf.mxu0
        %v432 = vadd.f32 0.0, %v431
        %433 = vmatmul.f32.gmra.mxu0 %v322
        %v434 = vpop.f32.mrf.mxu0
        %v435 = vadd.f32 0.0, %v434
        %436 = vmatmul.f32.gmra.mxu0 %v325
        %v437 = vpop.f32.mrf.mxu0
        %v438 = vadd.f32 0.0, %v437
        %439 = vmatmul.f32.gmra.mxu0 %v328
        %v440 = vpop.f32.mrf.mxu0
        %v441 = vadd.f32 0.0, %v440
        %442 = vmatmul.f32.gmra.mxu0 %v331
        %v443 = vpop.f32.mrf.mxu0
        %v444 = vadd.f32 0.0, %v443
        %445 = vmatmul.f32.gmra.mxu0 %v334
        %v446 = vpop.f32.mrf.mxu0
        %v447 = vadd.f32 0.0, %v446
        %448 = vmatmul.f32.gmra.mxu0 %v337
        %v449 = vpop.f32.mrf.mxu0
        %v450 = vadd.f32 0.0, %v449
        %451 = vmatmul.f32.gmra.mxu0 %v340
        %v452 = vpop.f32.mrf.mxu0
        %v453 = vadd.f32 0.0, %v452
        %454 = vmatmul.f32.gmra.mxu0 %v343
        %v455 = vpop.f32.mrf.mxu0
        %v456 = vadd.f32 0.0, %v455
        %457 = vmatmul.f32.gmra.mxu0 %v346
        %v458 = vpop.f32.mrf.mxu0
        %v459 = vadd.f32 0.0, %v458
        %460 = vmatmul.f32.gmra.mxu0 %v349
        %v461 = vpop.f32.mrf.mxu0
        %v462 = vadd.f32 0.0, %v461
        %463 = vmatmul.f32.gmra.mxu0 %v352
        %v464 = vpop.f32.mrf.mxu0
        %v465 = vadd.f32 0.0, %v464
        %466 = vmatmul.f32.gmra.mxu0 %v355
        %v467 = vpop.f32.mrf.mxu0
        %v468 = vadd.f32 0.0, %v467
        %469 = vmatmul.f32.gmra.mxu0 %v358
        %v470 = vpop.f32.mrf.mxu0
        %v471 = vadd.f32 0.0, %v470
        %472 = vmatmul.f32.gmra.mxu0 %v361
        %v473 = vpop.f32.mrf.mxu0
        %v474 = vadd.f32 0.0, %v473
        %475 = vmatmul.f32.gmra.mxu0 %v364
        %v476 = vpop.f32.mrf.mxu0
        %v477 = vadd.f32 0.0, %v476
        %478 = vmatmul.f32.gmra.mxu0 %v367
        %v479 = vpop.f32.mrf.mxu0
        %v480 = vadd.f32 0.0, %v479
        %481 = vmatmul.f32.gmra.mxu0 %v370
        %v482 = vpop.f32.mrf.mxu0
        %v483 = vadd.f32 0.0, %v482
        %484 = vmatmul.f32.gmra.mxu0 %v373
        %v485 = vpop.f32.mrf.mxu0
        %v486 = vadd.f32 0.0, %v485
        %487 = vmatmul.f32.gmra.mxu0 %v376
        %v488 = vpop.f32.mrf.mxu0
        %v489 = vadd.f32 0.0, %v488
        %490 = vmatmul.f32.gmra.mxu0 %v379
        %v491 = vpop.f32.mrf.mxu0
        %v492 = vadd.f32 0.0, %v491
        %493 = vmatmul.f32.gmra.mxu0 %v382
        %v494 = vpop.f32.mrf.mxu0
        %v495 = vadd.f32 0.0, %v494
        %496 = vmatmul.f32.gmra.mxu0 %v385
        %v497 = vpop.f32.mrf.mxu0
        %v498 = vadd.f32 0.0, %v497
        %499 = vmatmul.f32.gmra.mxu0 %v388
        %v500 = vpop.f32.mrf.mxu0
        %v501 = vadd.f32 0.0, %v500
        %502 = vmatmul.f32.gmra.mxu0 %v391
        %v503 = vpop.f32.mrf.mxu0
        %v504 = vadd.f32 0.0, %v503
        %505 = vmatmul.f32.gmra.mxu0 %v394
        %v506 = vpop.f32.mrf.mxu0
        %v507 = vadd.f32 0.0, %v506
        %508 = vdwg.mxu0
        %v510 = vsel %vm299, %v232, 0
        %v513 = vsel %vm299, %v233, 0
        %v516 = vsel %vm299, %v234, 0
        %v519 = vsel %vm299, %v235, 0
        %v522 = vsel %vm299, %v236, 0
        %v525 = vsel %vm299, %v237, 0
        %v528 = vsel %vm299, %v238, 0
        %v531 = vsel %vm299, %v239, 0
        %v534 = vsel %vm299, %v240, 0
        %v537 = vsel %vm299, %v241, 0
        %v540 = vsel %vm299, %v242, 0
        %v543 = vsel %vm299, %v243, 0
        %v546 = vsel %vm299, %v244, 0
        %v549 = vsel %vm299, %v245, 0
        %v552 = vsel %vm299, %v246, 0
        %v555 = vsel %vm299, %v247, 0
        %v558 = vsel %vm299, %v248, 0
        %v561 = vsel %vm299, %v249, 0
        %v564 = vsel %vm299, %v250, 0
        %v567 = vsel %vm299, %v251, 0
        %v570 = vsel %vm299, %v252, 0
        %v573 = vsel %vm299, %v253, 0
        %v576 = vsel %vm299, %v254, 0
        %v579 = vsel %vm299, %v255, 0
        %v582 = vsel %vm299, %v256, 0
        %v585 = vsel %vm299, %v257, 0
        %v588 = vsel %vm299, %v258, 0
        %v591 = vsel %vm299, %v259, 0
        %v594 = vsel %vm299, %v260, 0
        %v597 = vsel %vm299, %v261, 0
        %v600 = vsel %vm299, %v262, 0
        %v603 = vsel %vm299, %v263, 0
        %605 = vmatpush.msra.mxu0 0.0
        %606 = vmatpush.msra.mxu0 0.0
        %607 = vmatpush.msra.mxu0 0.0
        %608 = vmatpush.msra.mxu0 0.0
        %609 = vmatpush.msra.mxu0 0.0
        %610 = vmatpush.msra.mxu0 0.0
        %611 = vmatpush.msra.mxu0 0.0
        %612 = vmatpush.msra.mxu0 0.0
        %613 = vmatpush.msra.mxu0 0.0
        %614 = vmatpush.msra.mxu0 0.0
        %615 = vmatpush.msra.mxu0 0.0
        %616 = vmatpush.msra.mxu0 0.0
        %617 = vmatpush.msra.mxu0 0.0
        %618 = vmatpush.msra.mxu0 0.0
        %619 = vmatpush.msra.mxu0 0.0
        %620 = vmatpush.msra.mxu0 %v264
        %621 = vmatmul.f32.gmra.mxu0 %v510
        %v622 = vpop.f32.mrf.mxu0
        %v623 = vadd.f32 %v414, %v622
        %624 = vmatmul.f32.gmra.mxu0 %v513
        %v625 = vpop.f32.mrf.mxu0
        %v626 = vadd.f32 %v417, %v625
        %627 = vmatmul.f32.gmra.mxu0 %v516
        %v628 = vpop.f32.mrf.mxu0
        %v629 = vadd.f32 %v420, %v628
        %630 = vmatmul.f32.gmra.mxu0 %v519
        %v631 = vpop.f32.mrf.mxu0
        %v632 = vadd.f32 %v423, %v631
        %633 = vmatmul.f32.gmra.mxu0 %v522
        %v634 = vpop.f32.mrf.mxu0
        %v635 = vadd.f32 %v426, %v634
        %636 = vmatmul.f32.gmra.mxu0 %v525
        %v637 = vpop.f32.mrf.mxu0
        %v638 = vadd.f32 %v429, %v637
        %639 = vmatmul.f32.gmra.mxu0 %v528
        %v640 = vpop.f32.mrf.mxu0
        %v641 = vadd.f32 %v432, %v640
        %642 = vmatmul.f32.gmra.mxu0 %v531
        %v643 = vpop.f32.mrf.mxu0
        %v644 = vadd.f32 %v435, %v643
        %645 = vmatmul.f32.gmra.mxu0 %v534
        %v646 = vpop.f32.mrf.mxu0
        %v647 = vadd.f32 %v438, %v646
        %648 = vmatmul.f32.gmra.mxu0 %v537
        %v649 = vpop.f32.mrf.mxu0
        %v650 = vadd.f32 %v441, %v649
        %651 = vmatmul.f32.gmra.mxu0 %v540
        %v652 = vpop.f32.mrf.mxu0
        %v653 = vadd.f32 %v444, %v652
        %654 = vmatmul.f32.gmra.mxu0 %v543
        %v655 = vpop.f32.mrf.mxu0
        %v656 = vadd.f32 %v447, %v655
        %657 = vmatmul.f32.gmra.mxu0 %v546
        %v658 = vpop.f32.mrf.mxu0
        %v659 = vadd.f32 %v450, %v658
        %660 = vmatmul.f32.gmra.mxu0 %v549
        %v661 = vpop.f32.mrf.mxu0
        %v662 = vadd.f32 %v453, %v661
        %663 = vmatmul.f32.gmra.mxu0 %v552
        %v664 = vpop.f32.mrf.mxu0
        %v665 = vadd.f32 %v456, %v664
        %666 = vmatmul.f32.gmra.mxu0 %v555
        %v667 = vpop.f32.mrf.mxu0
        %v668 = vadd.f32 %v459, %v667
        %669 = vmatmul.f32.gmra.mxu0 %v558
        %v670 = vpop.f32.mrf.mxu0
        %v671 = vadd.f32 %v462, %v670
        %672 = vmatmul.f32.gmra.mxu0 %v561
        %v673 = vpop.f32.mrf.mxu0
        %v674 = vadd.f32 %v465, %v673
        %675 = vmatmul.f32.gmra.mxu0 %v564
        %v676 = vpop.f32.mrf.mxu0
        %v677 = vadd.f32 %v468, %v676
        %678 = vmatmul.f32.gmra.mxu0 %v567
        %v679 = vpop.f32.mrf.mxu0
        %v680 = vadd.f32 %v471, %v679
        %681 = vmatmul.f32.gmra.mxu0 %v570
        %v682 = vpop.f32.mrf.mxu0
        %v683 = vadd.f32 %v474, %v682
        %684 = vmatmul.f32.gmra.mxu0 %v573
        %v685 = vpop.f32.mrf.mxu0
        %v686 = vadd.f32 %v477, %v685
        %687 = vmatmul.f32.gmra.mxu0 %v576
        %v688 = vpop.f32.mrf.mxu0
        %v689 = vadd.f32 %v480, %v688
        %690 = vmatmul.f32.gmra.mxu0 %v579
        %v691 = vpop.f32.mrf.mxu0
        %v692 = vadd.f32 %v483, %v691
        %693 = vmatmul.f32.gmra.mxu0 %v582
        %v694 = vpop.f32.mrf.mxu0
        %v695 = vadd.f32 %v486, %v694
        %696 = vmatmul.f32.gmra.mxu0 %v585
        %v697 = vpop.f32.mrf.mxu0
        %v698 = vadd.f32 %v489, %v697
        %699 = vmatmul.f32.gmra.mxu0 %v588
        %v700 = vpop.f32.mrf.mxu0
        %v701 = vadd.f32 %v492, %v700
        %702 = vmatmul.f32.gmra.mxu0 %v591
        %v703 = vpop.f32.mrf.mxu0
        %v704 = vadd.f32 %v495, %v703
        %705 = vmatmul.f32.gmra.mxu0 %v594
        %v706 = vpop.f32.mrf.mxu0
        %v707 = vadd.f32 %v498, %v706
        %708 = vmatmul.f32.gmra.mxu0 %v597
        %v709 = vpop.f32.mrf.mxu0
        %v710 = vadd.f32 %v501, %v709
        %711 = vmatmul.f32.gmra.mxu0 %v600
        %v712 = vpop.f32.mrf.mxu0
        %v713 = vadd.f32 %v504, %v712
        %714 = vmatmul.f32.gmra.mxu0 %v603
        %v715 = vpop.f32.mrf.mxu0
        %v716 = vadd.f32 %v507, %v715
        %717 = vdwg.mxu0
        %v718 = vld [vmem:[%s228 + $0x2] sm:$0xff]
        %v719 = vld [vmem:[%s228 + $0xa] sm:$0xff]
        %v720 = vld [vmem:[%s228 + $0x1a] sm:$0xff]
        %v721 = vld [vmem:[%s228 + $0x22] sm:$0xff]
        %v722 = vld [vmem:[%s228 + $0x32] sm:$0xff]
        %v723 = vld [vmem:[%s228 + $0x3a] sm:$0xff]
        %v724 = vld [vmem:[%s228 + $0x4a] sm:$0xff]
        %v725 = vld [vmem:[%s228 + $0x52] sm:$0xff]
        %v726 = vld [vmem:[%s228 + $0x62] sm:$0xff]
        %v727 = vld [vmem:[%s228 + $0x6a] sm:$0xff]
        %v728 = vld [vmem:[%s228 + $0x7a] sm:$0xff]
        %v729 = vld [vmem:[%s228 + $0x82] sm:$0xff]
        %v730 = vld [vmem:[%s228 + $0x92] sm:$0xff]
        %v731 = vld [vmem:[%s228 + $0x9a] sm:$0xff]
        %v732 = vld [vmem:[%s228 + $0xaa] sm:$0xff]
        %v733 = vld [vmem:[%s228 + $0xb2] sm:$0xff]
        %v734 = vld [vmem:[%s228 + $0xc2] sm:$0xff]
        %v735 = vld [vmem:[%s228 + $0xca] sm:$0xff]
        %v736 = vld [vmem:[%s228 + $0xda] sm:$0xff]
        %v737 = vld [vmem:[%s228 + $0xe2] sm:$0xff]
        %v738 = vld [vmem:[%s228 + $0xf2] sm:$0xff]
        %v739 = vld [vmem:[%s228 + $0xfa] sm:$0xff]
        %v740 = vld [vmem:[%s228 + $0x10a] sm:$0xff]
        %v741 = vld [vmem:[%s228 + $0x112] sm:$0xff]
        %v742 = vld [vmem:[%s228 + $0x122] sm:$0xff]
        %v743 = vld [vmem:[%s228 + $0x12a] sm:$0xff]
        %v744 = vld [vmem:[%s228 + $0x13a] sm:$0xff]
        %v745 = vld [vmem:[%s228 + $0x142] sm:$0xff]
        %v746 = vld [vmem:[%s228 + $0x152] sm:$0xff]
        %v747 = vld [vmem:[%s228 + $0x15a] sm:$0xff]
        %v748 = vld [vmem:[%s228 + $0x16a] sm:$0xff]
        %v749 = vld [vmem:[%s228 + $0x172] sm:$0xff]
        %s750 = scalar_lea.vmem %s1, 16
        %v751 = vld [vmem:[%s750] sm:$0xff]
        %v753 = vsel %vm299, %v718, 0
        %v756 = vsel %vm299, %v719, 0
        %v759 = vsel %vm299, %v720, 0
        %v762 = vsel %vm299, %v721, 0
        %v765 = vsel %vm299, %v722, 0
        %v768 = vsel %vm299, %v723, 0
        %v771 = vsel %vm299, %v724, 0
        %v774 = vsel %vm299, %v725, 0
        %v777 = vsel %vm299, %v726, 0
        %v780 = vsel %vm299, %v727, 0
        %v783 = vsel %vm299, %v728, 0
        %v786 = vsel %vm299, %v729, 0
        %v789 = vsel %vm299, %v730, 0
        %v792 = vsel %vm299, %v731, 0
        %v795 = vsel %vm299, %v732, 0
        %v798 = vsel %vm299, %v733, 0
        %v801 = vsel %vm299, %v734, 0
        %v804 = vsel %vm299, %v735, 0
        %v807 = vsel %vm299, %v736, 0
        %v810 = vsel %vm299, %v737, 0
        %v813 = vsel %vm299, %v738, 0
        %v816 = vsel %vm299, %v739, 0
        %v819 = vsel %vm299, %v740, 0
        %v822 = vsel %vm299, %v741, 0
        %v825 = vsel %vm299, %v742, 0
        %v828 = vsel %vm299, %v743, 0
        %v831 = vsel %vm299, %v744, 0
        %v834 = vsel %vm299, %v745, 0
        %v837 = vsel %vm299, %v746, 0
        %v840 = vsel %vm299, %v747, 0
        %v843 = vsel %vm299, %v748, 0
        %v846 = vsel %vm299, %v749, 0
        %848 = vmatpush.msra.mxu0 0.0
        %849 = vmatpush.msra.mxu0 0.0
        %850 = vmatpush.msra.mxu0 0.0
        %851 = vmatpush.msra.mxu0 0.0
        %852 = vmatpush.msra.mxu0 0.0
        %853 = vmatpush.msra.mxu0 0.0
        %854 = vmatpush.msra.mxu0 0.0
        %855 = vmatpush.msra.mxu0 0.0
        %856 = vmatpush.msra.mxu0 0.0
        %857 = vmatpush.msra.mxu0 0.0
        %858 = vmatpush.msra.mxu0 0.0
        %859 = vmatpush.msra.mxu0 0.0
        %860 = vmatpush.msra.mxu0 0.0
        %861 = vmatpush.msra.mxu0 0.0
        %862 = vmatpush.msra.mxu0 0.0
        %863 = vmatpush.msra.mxu0 %v751
        %864 = vmatmul.f32.gmra.mxu0 %v753
        %v865 = vpop.f32.mrf.mxu0
        %v866 = vadd.f32 0.0, %v865
        %867 = vmatmul.f32.gmra.mxu0 %v756
        %v868 = vpop.f32.mrf.mxu0
        %v869 = vadd.f32 0.0, %v868
        %870 = vmatmul.f32.gmra.mxu0 %v759
        %v871 = vpop.f32.mrf.mxu0
        %v872 = vadd.f32 0.0, %v871
        %873 = vmatmul.f32.gmra.mxu0 %v762
        %v874 = vpop.f32.mrf.mxu0
        %v875 = vadd.f32 0.0, %v874
        %876 = vmatmul.f32.gmra.mxu0 %v765
        %v877 = vpop.f32.mrf.mxu0
        %v878 = vadd.f32 0.0, %v877
        %879 = vmatmul.f32.gmra.mxu0 %v768
        %v880 = vpop.f32.mrf.mxu0
        %v881 = vadd.f32 0.0, %v880
        %882 = vmatmul.f32.gmra.mxu0 %v771
        %v883 = vpop.f32.mrf.mxu0
        %v884 = vadd.f32 0.0, %v883
        %885 = vmatmul.f32.gmra.mxu0 %v774
        %v886 = vpop.f32.mrf.mxu0
        %v887 = vadd.f32 0.0, %v886
        %888 = vmatmul.f32.gmra.mxu0 %v777
        %v889 = vpop.f32.mrf.mxu0
        %v890 = vadd.f32 0.0, %v889
        %891 = vmatmul.f32.gmra.mxu0 %v780
        %v892 = vpop.f32.mrf.mxu0
        %v893 = vadd.f32 0.0, %v892
        %894 = vmatmul.f32.gmra.mxu0 %v783
        %v895 = vpop.f32.mrf.mxu0
        %v896 = vadd.f32 0.0, %v895
        %897 = vmatmul.f32.gmra.mxu0 %v786
        %v898 = vpop.f32.mrf.mxu0
        %v899 = vadd.f32 0.0, %v898
        %900 = vmatmul.f32.gmra.mxu0 %v789
        %v901 = vpop.f32.mrf.mxu0
        %v902 = vadd.f32 0.0, %v901
        %903 = vmatmul.f32.gmra.mxu0 %v792
        %v904 = vpop.f32.mrf.mxu0
        %v905 = vadd.f32 0.0, %v904
        %906 = vmatmul.f32.gmra.mxu0 %v795
        %v907 = vpop.f32.mrf.mxu0
        %v908 = vadd.f32 0.0, %v907
        %909 = vmatmul.f32.gmra.mxu0 %v798
        %v910 = vpop.f32.mrf.mxu0
        %v911 = vadd.f32 0.0, %v910
        %912 = vmatmul.f32.gmra.mxu0 %v801
        %v913 = vpop.f32.mrf.mxu0
        %v914 = vadd.f32 0.0, %v913
        %915 = vmatmul.f32.gmra.mxu0 %v804
        %v916 = vpop.f32.mrf.mxu0
        %v917 = vadd.f32 0.0, %v916
        %918 = vmatmul.f32.gmra.mxu0 %v807
        %v919 = vpop.f32.mrf.mxu0
        %v920 = vadd.f32 0.0, %v919
        %921 = vmatmul.f32.gmra.mxu0 %v810
        %v922 = vpop.f32.mrf.mxu0
        %v923 = vadd.f32 0.0, %v922
        %924 = vmatmul.f32.gmra.mxu0 %v813
        %v925 = vpop.f32.mrf.mxu0
        %v926 = vadd.f32 0.0, %v925
        %927 = vmatmul.f32.gmra.mxu0 %v816
        %v928 = vpop.f32.mrf.mxu0
        %v929 = vadd.f32 0.0, %v928
        %930 = vmatmul.f32.gmra.mxu0 %v819
        %v931 = vpop.f32.mrf.mxu0
        %v932 = vadd.f32 0.0, %v931
        %933 = vmatmul.f32.gmra.mxu0 %v822
        %v934 = vpop.f32.mrf.mxu0
        %v935 = vadd.f32 0.0, %v934
        %936 = vmatmul.f32.gmra.mxu0 %v825
        %v937 = vpop.f32.mrf.mxu0
        %v938 = vadd.f32 0.0, %v937
        %939 = vmatmul.f32.gmra.mxu0 %v828
        %v940 = vpop.f32.mrf.mxu0
        %v941 = vadd.f32 0.0, %v940
        %942 = vmatmul.f32.gmra.mxu0 %v831
        %v943 = vpop.f32.mrf.mxu0
        %v944 = vadd.f32 0.0, %v943
        %945 = vmatmul.f32.gmra.mxu0 %v834
        %v946 = vpop.f32.mrf.mxu0
        %v947 = vadd.f32 0.0, %v946
        %948 = vmatmul.f32.gmra.mxu0 %v837
        %v949 = vpop.f32.mrf.mxu0
        %v950 = vadd.f32 0.0, %v949
        %951 = vmatmul.f32.gmra.mxu0 %v840
        %v952 = vpop.f32.mrf.mxu0
        %v953 = vadd.f32 0.0, %v952
        %954 = vmatmul.f32.gmra.mxu0 %v843
        %v955 = vpop.f32.mrf.mxu0
        %v956 = vadd.f32 0.0, %v955
        %957 = vmatmul.f32.gmra.mxu0 %v846
        %v958 = vpop.f32.mrf.mxu0
        %v959 = vadd.f32 0.0, %v958
        %960 = vdwg.mxu0
        %v961 = vadd.f32 %v623, %v866
        %v962 = vadd.f32 %v626, %v869
        %v963 = vadd.f32 %v629, %v872
        %v964 = vadd.f32 %v632, %v875
        %v965 = vadd.f32 %v635, %v878
        %v966 = vadd.f32 %v638, %v881
        %v967 = vadd.f32 %v641, %v884
        %v968 = vadd.f32 %v644, %v887
        %v969 = vadd.f32 %v647, %v890
        %v970 = vadd.f32 %v650, %v893
        %v971 = vadd.f32 %v653, %v896
        %v972 = vadd.f32 %v656, %v899
        %v973 = vadd.f32 %v659, %v902
        %v974 = vadd.f32 %v662, %v905
        %v975 = vadd.f32 %v665, %v908
        %v976 = vadd.f32 %v668, %v911
        %v977 = vadd.f32 %v671, %v914
        %v978 = vadd.f32 %v674, %v917
        %v979 = vadd.f32 %v677, %v920
        %v980 = vadd.f32 %v680, %v923
        %v981 = vadd.f32 %v683, %v926
        %v982 = vadd.f32 %v686, %v929
        %v983 = vadd.f32 %v689, %v932
        %v984 = vadd.f32 %v692, %v935
        %v985 = vadd.f32 %v695, %v938
        %v986 = vadd.f32 %v698, %v941
        %v987 = vadd.f32 %v701, %v944
        %v988 = vadd.f32 %v704, %v947
        %v989 = vadd.f32 %v707, %v950
        %v990 = vadd.f32 %v710, %v953
        %v991 = vadd.f32 %v713, %v956
        %v992 = vadd.f32 %v716, %v959
        %s993 = scalar_lea.vmem %s228, 24
        %v994 = vld [vmem:[%s993] sm:$0xff]
        %v995 = vld [vmem:[%s993 + $0x8] sm:$0xff]
        %v996 = vld [vmem:[%s993 + $0x18] sm:$0xff]
        %v997 = vld [vmem:[%s993 + $0x20] sm:$0xff]
        %v998 = vld [vmem:[%s993 + $0x30] sm:$0xff]
        %v999 = vld [vmem:[%s993 + $0x38] sm:$0xff]
        %v1000 = vld [vmem:[%s993 + $0x48] sm:$0xff]
        %v1001 = vld [vmem:[%s993 + $0x50] sm:$0xff]
        %v1002 = vld [vmem:[%s993 + $0x60] sm:$0xff]
        %v1003 = vld [vmem:[%s993 + $0x68] sm:$0xff]
        %v1004 = vld [vmem:[%s993 + $0x78] sm:$0xff]
        %v1005 = vld [vmem:[%s993 + $0x80] sm:$0xff]
        %v1006 = vld [vmem:[%s993 + $0x90] sm:$0xff]
        %v1007 = vld [vmem:[%s993 + $0x98] sm:$0xff]
        %v1008 = vld [vmem:[%s993 + $0xa8] sm:$0xff]
        %v1009 = vld [vmem:[%s993 + $0xb0] sm:$0xff]
        %v1010 = vld [vmem:[%s993 + $0xc0] sm:$0xff]
        %v1011 = vld [vmem:[%s993 + $0xc8] sm:$0xff]
        %v1012 = vld [vmem:[%s993 + $0xd8] sm:$0xff]
        %v1013 = vld [vmem:[%s993 + $0xe0] sm:$0xff]
        %v1014 = vld [vmem:[%s993 + $0xf0] sm:$0xff]
        %v1015 = vld [vmem:[%s993 + $0xf8] sm:$0xff]
        %v1016 = vld [vmem:[%s993 + $0x108] sm:$0xff]
        %v1017 = vld [vmem:[%s993 + $0x110] sm:$0xff]
        %v1018 = vld [vmem:[%s993 + $0x120] sm:$0xff]
        %v1019 = vld [vmem:[%s993 + $0x128] sm:$0xff]
        %v1020 = vld [vmem:[%s993 + $0x138] sm:$0xff]
        %v1021 = vld [vmem:[%s993 + $0x140] sm:$0xff]
        %v1022 = vld [vmem:[%s993 + $0x150] sm:$0xff]
        %v1023 = vld [vmem:[%s993 + $0x158] sm:$0xff]
        %v1024 = vld [vmem:[%s993 + $0x168] sm:$0xff]
        %v1025 = vld [vmem:[%s993 + $0x170] sm:$0xff]
        %s1026 = scalar_lea.vmem %s1, 24
        %v1027 = vld [vmem:[%s1026] sm:$0xff]
        %v1029 = vsel %vm299, %v994, 0
        %v1032 = vsel %vm299, %v995, 0
        %v1035 = vsel %vm299, %v996, 0
        %v1038 = vsel %vm299, %v997, 0
        %v1041 = vsel %vm299, %v998, 0
        %v1044 = vsel %vm299, %v999, 0
        %v1047 = vsel %vm299, %v1000, 0
        %v1050 = vsel %vm299, %v1001, 0
        %v1053 = vsel %vm299, %v1002, 0
        %v1056 = vsel %vm299, %v1003, 0
        %v1059 = vsel %vm299, %v1004, 0
        %v1062 = vsel %vm299, %v1005, 0
        %v1065 = vsel %vm299, %v1006, 0
        %v1068 = vsel %vm299, %v1007, 0
        %v1071 = vsel %vm299, %v1008, 0
        %v1074 = vsel %vm299, %v1009, 0
        %v1077 = vsel %vm299, %v1010, 0
        %v1080 = vsel %vm299, %v1011, 0
        %v1083 = vsel %vm299, %v1012, 0
        %v1086 = vsel %vm299, %v1013, 0
        %v1089 = vsel %vm299, %v1014, 0
        %v1092 = vsel %vm299, %v1015, 0
        %v1095 = vsel %vm299, %v1016, 0
        %v1098 = vsel %vm299, %v1017, 0
        %v1101 = vsel %vm299, %v1018, 0
        %v1104 = vsel %vm299, %v1019, 0
        %v1107 = vsel %vm299, %v1020, 0
        %v1110 = vsel %vm299, %v1021, 0
        %v1113 = vsel %vm299, %v1022, 0
        %v1116 = vsel %vm299, %v1023, 0
        %v1119 = vsel %vm299, %v1024, 0
        %v1122 = vsel %vm299, %v1025, 0
        %1124 = vmatpush.msra.mxu0 0.0
        %1125 = vmatpush.msra.mxu0 0.0
        %1126 = vmatpush.msra.mxu0 0.0
        %1127 = vmatpush.msra.mxu0 0.0
        %1128 = vmatpush.msra.mxu0 0.0
        %1129 = vmatpush.msra.mxu0 0.0
        %1130 = vmatpush.msra.mxu0 0.0
        %1131 = vmatpush.msra.mxu0 0.0
        %1132 = vmatpush.msra.mxu0 0.0
        %1133 = vmatpush.msra.mxu0 0.0
        %1134 = vmatpush.msra.mxu0 0.0
        %1135 = vmatpush.msra.mxu0 0.0
        %1136 = vmatpush.msra.mxu0 0.0
        %1137 = vmatpush.msra.mxu0 0.0
        %1138 = vmatpush.msra.mxu0 0.0
        %1139 = vmatpush.msra.mxu0 %v1027
        %1140 = vmatmul.f32.gmra.mxu0 %v1029
        %v1141 = vpop.f32.mrf.mxu0
        %v1142 = vadd.f32 0.0, %v1141
        %1143 = vmatmul.f32.gmra.mxu0 %v1032
        %v1144 = vpop.f32.mrf.mxu0
        %v1145 = vadd.f32 0.0, %v1144
        %1146 = vmatmul.f32.gmra.mxu0 %v1035
        %v1147 = vpop.f32.mrf.mxu0
        %v1148 = vadd.f32 0.0, %v1147
        %1149 = vmatmul.f32.gmra.mxu0 %v1038
        %v1150 = vpop.f32.mrf.mxu0
        %v1151 = vadd.f32 0.0, %v1150
        %1152 = vmatmul.f32.gmra.mxu0 %v1041
        %v1153 = vpop.f32.mrf.mxu0
        %v1154 = vadd.f32 0.0, %v1153
        %1155 = vmatmul.f32.gmra.mxu0 %v1044
        %v1156 = vpop.f32.mrf.mxu0
        %v1157 = vadd.f32 0.0, %v1156
        %1158 = vmatmul.f32.gmra.mxu0 %v1047
        %v1159 = vpop.f32.mrf.mxu0
        %v1160 = vadd.f32 0.0, %v1159
        %1161 = vmatmul.f32.gmra.mxu0 %v1050
        %v1162 = vpop.f32.mrf.mxu0
        %v1163 = vadd.f32 0.0, %v1162
        %1164 = vmatmul.f32.gmra.mxu0 %v1053
        %v1165 = vpop.f32.mrf.mxu0
        %v1166 = vadd.f32 0.0, %v1165
        %1167 = vmatmul.f32.gmra.mxu0 %v1056
        %v1168 = vpop.f32.mrf.mxu0
        %v1169 = vadd.f32 0.0, %v1168
        %1170 = vmatmul.f32.gmra.mxu0 %v1059
        %v1171 = vpop.f32.mrf.mxu0
        %v1172 = vadd.f32 0.0, %v1171
        %1173 = vmatmul.f32.gmra.mxu0 %v1062
        %v1174 = vpop.f32.mrf.mxu0
        %v1175 = vadd.f32 0.0, %v1174
        %1176 = vmatmul.f32.gmra.mxu0 %v1065
        %v1177 = vpop.f32.mrf.mxu0
        %v1178 = vadd.f32 0.0, %v1177
        %1179 = vmatmul.f32.gmra.mxu0 %v1068
        %v1180 = vpop.f32.mrf.mxu0
        %v1181 = vadd.f32 0.0, %v1180
        %1182 = vmatmul.f32.gmra.mxu0 %v1071
        %v1183 = vpop.f32.mrf.mxu0
        %v1184 = vadd.f32 0.0, %v1183
        %1185 = vmatmul.f32.gmra.mxu0 %v1074
        %v1186 = vpop.f32.mrf.mxu0
        %v1187 = vadd.f32 0.0, %v1186
        %1188 = vmatmul.f32.gmra.mxu0 %v1077
        %v1189 = vpop.f32.mrf.mxu0
        %v1190 = vadd.f32 0.0, %v1189
        %1191 = vmatmul.f32.gmra.mxu0 %v1080
        %v1192 = vpop.f32.mrf.mxu0
        %v1193 = vadd.f32 0.0, %v1192
        %1194 = vmatmul.f32.gmra.mxu0 %v1083
        %v1195 = vpop.f32.mrf.mxu0
        %v1196 = vadd.f32 0.0, %v1195
        %1197 = vmatmul.f32.gmra.mxu0 %v1086
        %v1198 = vpop.f32.mrf.mxu0
        %v1199 = vadd.f32 0.0, %v1198
        %1200 = vmatmul.f32.gmra.mxu0 %v1089
        %v1201 = vpop.f32.mrf.mxu0
        %v1202 = vadd.f32 0.0, %v1201
        %1203 = vmatmul.f32.gmra.mxu0 %v1092
        %v1204 = vpop.f32.mrf.mxu0
        %v1205 = vadd.f32 0.0, %v1204
        %1206 = vmatmul.f32.gmra.mxu0 %v1095
        %v1207 = vpop.f32.mrf.mxu0
        %v1208 = vadd.f32 0.0, %v1207
        %1209 = vmatmul.f32.gmra.mxu0 %v1098
        %v1210 = vpop.f32.mrf.mxu0
        %v1211 = vadd.f32 0.0, %v1210
        %1212 = vmatmul.f32.gmra.mxu0 %v1101
        %v1213 = vpop.f32.mrf.mxu0
        %v1214 = vadd.f32 0.0, %v1213
        %1215 = vmatmul.f32.gmra.mxu0 %v1104
        %v1216 = vpop.f32.mrf.mxu0
        %v1217 = vadd.f32 0.0, %v1216
        %1218 = vmatmul.f32.gmra.mxu0 %v1107
        %v1219 = vpop.f32.mrf.mxu0
        %v1220 = vadd.f32 0.0, %v1219
        %1221 = vmatmul.f32.gmra.mxu0 %v1110
        %v1222 = vpop.f32.mrf.mxu0
        %v1223 = vadd.f32 0.0, %v1222
        %1224 = vmatmul.f32.gmra.mxu0 %v1113
        %v1225 = vpop.f32.mrf.mxu0
        %v1226 = vadd.f32 0.0, %v1225
        %1227 = vmatmul.f32.gmra.mxu0 %v1116
        %v1228 = vpop.f32.mrf.mxu0
        %v1229 = vadd.f32 0.0, %v1228
        %1230 = vmatmul.f32.gmra.mxu0 %v1119
        %v1231 = vpop.f32.mrf.mxu0
        %v1232 = vadd.f32 0.0, %v1231
        %1233 = vmatmul.f32.gmra.mxu0 %v1122
        %v1234 = vpop.f32.mrf.mxu0
        %v1235 = vadd.f32 0.0, %v1234
        %1236 = vdwg.mxu0
        %v1237 = vadd.f32 %v961, %v1142
        %v1238 = vadd.f32 %v962, %v1145
        %v1239 = vadd.f32 %v963, %v1148
        %v1240 = vadd.f32 %v964, %v1151
        %v1241 = vadd.f32 %v965, %v1154
        %v1242 = vadd.f32 %v966, %v1157
        %v1243 = vadd.f32 %v967, %v1160
        %v1244 = vadd.f32 %v968, %v1163
        %v1245 = vadd.f32 %v969, %v1166
        %v1246 = vadd.f32 %v970, %v1169
        %v1247 = vadd.f32 %v971, %v1172
        %v1248 = vadd.f32 %v972, %v1175
        %v1249 = vadd.f32 %v973, %v1178
        %v1250 = vadd.f32 %v974, %v1181
        %v1251 = vadd.f32 %v975, %v1184
        %v1252 = vadd.f32 %v976, %v1187
        %v1253 = vadd.f32 %v977, %v1190
        %v1254 = vadd.f32 %v978, %v1193
        %v1255 = vadd.f32 %v979, %v1196
        %v1256 = vadd.f32 %v980, %v1199
        %v1257 = vadd.f32 %v981, %v1202
        %v1258 = vadd.f32 %v982, %v1205
        %v1259 = vadd.f32 %v983, %v1208
        %v1260 = vadd.f32 %v984, %v1211
        %v1261 = vadd.f32 %v985, %v1214
        %v1262 = vadd.f32 %v986, %v1217
        %v1263 = vadd.f32 %v987, %v1220
        %v1264 = vadd.f32 %v988, %v1223
        %v1265 = vadd.f32 %v989, %v1226
        %v1266 = vadd.f32 %v990, %v1229
        %v1267 = vadd.f32 %v991, %v1232
        %v1268 = vadd.f32 %v992, %v1235
        %v1269 = vld [vmem:[%s993 + $0x1] sm:$0xff]
        %v1270 = vld [vmem:[%s993 + $0x9] sm:$0xff]
        %v1271 = vld [vmem:[%s993 + $0x19] sm:$0xff]
        %v1272 = vld [vmem:[%s993 + $0x21] sm:$0xff]
        %v1273 = vld [vmem:[%s993 + $0x31] sm:$0xff]
        %v1274 = vld [vmem:[%s993 + $0x39] sm:$0xff]
        %v1275 = vld [vmem:[%s993 + $0x49] sm:$0xff]
        %v1276 = vld [vmem:[%s993 + $0x51] sm:$0xff]
        %v1277 = vld [vmem:[%s993 + $0x61] sm:$0xff]
        %v1278 = vld [vmem:[%s993 + $0x69] sm:$0xff]
        %v1279 = vld [vmem:[%s993 + $0x79] sm:$0xff]
        %v1280 = vld [vmem:[%s993 + $0x81] sm:$0xff]
        %v1281 = vld [vmem:[%s993 + $0x91] sm:$0xff]
        %v1282 = vld [vmem:[%s993 + $0x99] sm:$0xff]
        %v1283 = vld [vmem:[%s993 + $0xa9] sm:$0xff]
        %v1284 = vld [vmem:[%s993 + $0xb1] sm:$0xff]
        %v1285 = vld [vmem:[%s993 + $0xc1] sm:$0xff]
        %v1286 = vld [vmem:[%s993 + $0xc9] sm:$0xff]
        %v1287 = vld [vmem:[%s993 + $0xd9] sm:$0xff]
        %v1288 = vld [vmem:[%s993 + $0xe1] sm:$0xff]
        %v1289 = vld [vmem:[%s993 + $0xf1] sm:$0xff]
        %v1290 = vld [vmem:[%s993 + $0xf9] sm:$0xff]
        %v1291 = vld [vmem:[%s993 + $0x109] sm:$0xff]
        %v1292 = vld [vmem:[%s993 + $0x111] sm:$0xff]
        %v1293 = vld [vmem:[%s993 + $0x121] sm:$0xff]
        %v1294 = vld [vmem:[%s993 + $0x129] sm:$0xff]
        %v1295 = vld [vmem:[%s993 + $0x139] sm:$0xff]
        %v1296 = vld [vmem:[%s993 + $0x141] sm:$0xff]
        %v1297 = vld [vmem:[%s993 + $0x151] sm:$0xff]
        %v1298 = vld [vmem:[%s993 + $0x159] sm:$0xff]
        %v1299 = vld [vmem:[%s993 + $0x169] sm:$0xff]
        %v1300 = vld [vmem:[%s993 + $0x171] sm:$0xff]
        %s1301 = scalar_lea.vmem %s1, 32
        %v1302 = vld [vmem:[%s1301] sm:$0xff]
        %v1304 = vsel %vm299, %v1269, 0
        %v1307 = vsel %vm299, %v1270, 0
        %v1310 = vsel %vm299, %v1271, 0
        %v1313 = vsel %vm299, %v1272, 0
        %v1316 = vsel %vm299, %v1273, 0
        %v1319 = vsel %vm299, %v1274, 0
        %v1322 = vsel %vm299, %v1275, 0
        %v1325 = vsel %vm299, %v1276, 0
        %v1328 = vsel %vm299, %v1277, 0
        %v1331 = vsel %vm299, %v1278, 0
        %v1334 = vsel %vm299, %v1279, 0
        %v1337 = vsel %vm299, %v1280, 0
        %v1340 = vsel %vm299, %v1281, 0
        %v1343 = vsel %vm299, %v1282, 0
        %v1346 = vsel %vm299, %v1283, 0
        %v1349 = vsel %vm299, %v1284, 0
        %v1352 = vsel %vm299, %v1285, 0
        %v1355 = vsel %vm299, %v1286, 0
        %v1358 = vsel %vm299, %v1287, 0
        %v1361 = vsel %vm299, %v1288, 0
        %v1364 = vsel %vm299, %v1289, 0
        %v1367 = vsel %vm299, %v1290, 0
        %v1370 = vsel %vm299, %v1291, 0
        %v1373 = vsel %vm299, %v1292, 0
        %v1376 = vsel %vm299, %v1293, 0
        %v1379 = vsel %vm299, %v1294, 0
        %v1382 = vsel %vm299, %v1295, 0
        %v1385 = vsel %vm299, %v1296, 0
        %v1388 = vsel %vm299, %v1297, 0
        %v1391 = vsel %vm299, %v1298, 0
        %v1394 = vsel %vm299, %v1299, 0
        %v1397 = vsel %vm299, %v1300, 0
        %1399 = vmatpush.msra.mxu0 0.0
        %1400 = vmatpush.msra.mxu0 0.0
        %1401 = vmatpush.msra.mxu0 0.0
        %1402 = vmatpush.msra.mxu0 0.0
        %1403 = vmatpush.msra.mxu0 0.0
        %1404 = vmatpush.msra.mxu0 0.0
        %1405 = vmatpush.msra.mxu0 0.0
        %1406 = vmatpush.msra.mxu0 0.0
        %1407 = vmatpush.msra.mxu0 0.0
        %1408 = vmatpush.msra.mxu0 0.0
        %1409 = vmatpush.msra.mxu0 0.0
        %1410 = vmatpush.msra.mxu0 0.0
        %1411 = vmatpush.msra.mxu0 0.0
        %1412 = vmatpush.msra.mxu0 0.0
        %1413 = vmatpush.msra.mxu0 0.0
        %1414 = vmatpush.msra.mxu0 %v1302
        %1415 = vmatmul.f32.gmra.mxu0 %v1304
        %v1416 = vpop.f32.mrf.mxu0
        %v1417 = vadd.f32 0.0, %v1416
        %1418 = vmatmul.f32.gmra.mxu0 %v1307
        %v1419 = vpop.f32.mrf.mxu0
        %v1420 = vadd.f32 0.0, %v1419
        %1421 = vmatmul.f32.gmra.mxu0 %v1310
        %v1422 = vpop.f32.mrf.mxu0
        %v1423 = vadd.f32 0.0, %v1422
        %1424 = vmatmul.f32.gmra.mxu0 %v1313
        %v1425 = vpop.f32.mrf.mxu0
        %v1426 = vadd.f32 0.0, %v1425
        %1427 = vmatmul.f32.gmra.mxu0 %v1316
        %v1428 = vpop.f32.mrf.mxu0
        %v1429 = vadd.f32 0.0, %v1428
        %1430 = vmatmul.f32.gmra.mxu0 %v1319
        %v1431 = vpop.f32.mrf.mxu0
        %v1432 = vadd.f32 0.0, %v1431
        %1433 = vmatmul.f32.gmra.mxu0 %v1322
        %v1434 = vpop.f32.mrf.mxu0
        %v1435 = vadd.f32 0.0, %v1434
        %1436 = vmatmul.f32.gmra.mxu0 %v1325
        %v1437 = vpop.f32.mrf.mxu0
        %v1438 = vadd.f32 0.0, %v1437
        %1439 = vmatmul.f32.gmra.mxu0 %v1328
        %v1440 = vpop.f32.mrf.mxu0
        %v1441 = vadd.f32 0.0, %v1440
        %1442 = vmatmul.f32.gmra.mxu0 %v1331
        %v1443 = vpop.f32.mrf.mxu0
        %v1444 = vadd.f32 0.0, %v1443
        %1445 = vmatmul.f32.gmra.mxu0 %v1334
        %v1446 = vpop.f32.mrf.mxu0
        %v1447 = vadd.f32 0.0, %v1446
        %1448 = vmatmul.f32.gmra.mxu0 %v1337
        %v1449 = vpop.f32.mrf.mxu0
        %v1450 = vadd.f32 0.0, %v1449
        %1451 = vmatmul.f32.gmra.mxu0 %v1340
        %v1452 = vpop.f32.mrf.mxu0
        %v1453 = vadd.f32 0.0, %v1452
        %1454 = vmatmul.f32.gmra.mxu0 %v1343
        %v1455 = vpop.f32.mrf.mxu0
        %v1456 = vadd.f32 0.0, %v1455
        %1457 = vmatmul.f32.gmra.mxu0 %v1346
        %v1458 = vpop.f32.mrf.mxu0
        %v1459 = vadd.f32 0.0, %v1458
        %1460 = vmatmul.f32.gmra.mxu0 %v1349
        %v1461 = vpop.f32.mrf.mxu0
        %v1462 = vadd.f32 0.0, %v1461
        %1463 = vmatmul.f32.gmra.mxu0 %v1352
        %v1464 = vpop.f32.mrf.mxu0
        %v1465 = vadd.f32 0.0, %v1464
        %1466 = vmatmul.f32.gmra.mxu0 %v1355
        %v1467 = vpop.f32.mrf.mxu0
        %v1468 = vadd.f32 0.0, %v1467
        %1469 = vmatmul.f32.gmra.mxu0 %v1358
        %v1470 = vpop.f32.mrf.mxu0
        %v1471 = vadd.f32 0.0, %v1470
        %1472 = vmatmul.f32.gmra.mxu0 %v1361
        %v1473 = vpop.f32.mrf.mxu0
        %v1474 = vadd.f32 0.0, %v1473
        %1475 = vmatmul.f32.gmra.mxu0 %v1364
        %v1476 = vpop.f32.mrf.mxu0
        %v1477 = vadd.f32 0.0, %v1476
        %1478 = vmatmul.f32.gmra.mxu0 %v1367
        %v1479 = vpop.f32.mrf.mxu0
        %v1480 = vadd.f32 0.0, %v1479
        %1481 = vmatmul.f32.gmra.mxu0 %v1370
        %v1482 = vpop.f32.mrf.mxu0
        %v1483 = vadd.f32 0.0, %v1482
        %1484 = vmatmul.f32.gmra.mxu0 %v1373
        %v1485 = vpop.f32.mrf.mxu0
        %v1486 = vadd.f32 0.0, %v1485
        %1487 = vmatmul.f32.gmra.mxu0 %v1376
        %v1488 = vpop.f32.mrf.mxu0
        %v1489 = vadd.f32 0.0, %v1488
        %1490 = vmatmul.f32.gmra.mxu0 %v1379
        %v1491 = vpop.f32.mrf.mxu0
        %v1492 = vadd.f32 0.0, %v1491
        %1493 = vmatmul.f32.gmra.mxu0 %v1382
        %v1494 = vpop.f32.mrf.mxu0
        %v1495 = vadd.f32 0.0, %v1494
        %1496 = vmatmul.f32.gmra.mxu0 %v1385
        %v1497 = vpop.f32.mrf.mxu0
        %v1498 = vadd.f32 0.0, %v1497
        %1499 = vmatmul.f32.gmra.mxu0 %v1388
        %v1500 = vpop.f32.mrf.mxu0
        %v1501 = vadd.f32 0.0, %v1500
        %1502 = vmatmul.f32.gmra.mxu0 %v1391
        %v1503 = vpop.f32.mrf.mxu0
        %v1504 = vadd.f32 0.0, %v1503
        %1505 = vmatmul.f32.gmra.mxu0 %v1394
        %v1506 = vpop.f32.mrf.mxu0
        %v1507 = vadd.f32 0.0, %v1506
        %1508 = vmatmul.f32.gmra.mxu0 %v1397
        %v1509 = vpop.f32.mrf.mxu0
        %v1510 = vadd.f32 0.0, %v1509
        %1511 = vdwg.mxu0
        %v1512 = vadd.f32 %v1237, %v1417
        %v1513 = vadd.f32 %v1238, %v1420
        %v1514 = vadd.f32 %v1239, %v1423
        %v1515 = vadd.f32 %v1240, %v1426
        %v1516 = vadd.f32 %v1241, %v1429
        %v1517 = vadd.f32 %v1242, %v1432
        %v1518 = vadd.f32 %v1243, %v1435
        %v1519 = vadd.f32 %v1244, %v1438
        %v1520 = vadd.f32 %v1245, %v1441
        %v1521 = vadd.f32 %v1246, %v1444
        %v1522 = vadd.f32 %v1247, %v1447
        %v1523 = vadd.f32 %v1248, %v1450
        %v1524 = vadd.f32 %v1249, %v1453
        %v1525 = vadd.f32 %v1250, %v1456
        %v1526 = vadd.f32 %v1251, %v1459
        %v1527 = vadd.f32 %v1252, %v1462
        %v1528 = vadd.f32 %v1253, %v1465
        %v1529 = vadd.f32 %v1254, %v1468
        %v1530 = vadd.f32 %v1255, %v1471
        %v1531 = vadd.f32 %v1256, %v1474
        %v1532 = vadd.f32 %v1257, %v1477
        %v1533 = vadd.f32 %v1258, %v1480
        %v1534 = vadd.f32 %v1259, %v1483
        %v1535 = vadd.f32 %v1260, %v1486
        %v1536 = vadd.f32 %v1261, %v1489
        %v1537 = vadd.f32 %v1262, %v1492
        %v1538 = vadd.f32 %v1263, %v1495
        %v1539 = vadd.f32 %v1264, %v1498
        %v1540 = vadd.f32 %v1265, %v1501
        %v1541 = vadd.f32 %v1266, %v1504
        %v1542 = vadd.f32 %v1267, %v1507
        %v1543 = vadd.f32 %v1268, %v1510
        %v1544 = vld [vmem:[%s993 + $0x2] sm:$0xff]
        %v1545 = vld [vmem:[%s993 + $0xa] sm:$0xff]
        %v1546 = vld [vmem:[%s993 + $0x1a] sm:$0xff]
        %v1547 = vld [vmem:[%s993 + $0x22] sm:$0xff]
        %v1548 = vld [vmem:[%s993 + $0x32] sm:$0xff]
        %v1549 = vld [vmem:[%s993 + $0x3a] sm:$0xff]
        %v1550 = vld [vmem:[%s993 + $0x4a] sm:$0xff]
        %v1551 = vld [vmem:[%s993 + $0x52] sm:$0xff]
        %v1552 = vld [vmem:[%s993 + $0x62] sm:$0xff]
        %v1553 = vld [vmem:[%s993 + $0x6a] sm:$0xff]
        %v1554 = vld [vmem:[%s993 + $0x7a] sm:$0xff]
        %v1555 = vld [vmem:[%s993 + $0x82] sm:$0xff]
        %v1556 = vld [vmem:[%s993 + $0x92] sm:$0xff]
        %v1557 = vld [vmem:[%s993 + $0x9a] sm:$0xff]
        %v1558 = vld [vmem:[%s993 + $0xaa] sm:$0xff]
        %v1559 = vld [vmem:[%s993 + $0xb2] sm:$0xff]
        %v1560 = vld [vmem:[%s993 + $0xc2] sm:$0xff]
        %v1561 = vld [vmem:[%s993 + $0xca] sm:$0xff]
        %v1562 = vld [vmem:[%s993 + $0xda] sm:$0xff]
        %v1563 = vld [vmem:[%s993 + $0xe2] sm:$0xff]
        %v1564 = vld [vmem:[%s993 + $0xf2] sm:$0xff]
        %v1565 = vld [vmem:[%s993 + $0xfa] sm:$0xff]
        %v1566 = vld [vmem:[%s993 + $0x10a] sm:$0xff]
        %v1567 = vld [vmem:[%s993 + $0x112] sm:$0xff]
        %v1568 = vld [vmem:[%s993 + $0x122] sm:$0xff]
        %v1569 = vld [vmem:[%s993 + $0x12a] sm:$0xff]
        %v1570 = vld [vmem:[%s993 + $0x13a] sm:$0xff]
        %v1571 = vld [vmem:[%s993 + $0x142] sm:$0xff]
        %v1572 = vld [vmem:[%s993 + $0x152] sm:$0xff]
        %v1573 = vld [vmem:[%s993 + $0x15a] sm:$0xff]
        %v1574 = vld [vmem:[%s993 + $0x16a] sm:$0xff]
        %v1575 = vld [vmem:[%s993 + $0x172] sm:$0xff]
        %s1576 = scalar_lea.vmem %s1, 40
        %v1577 = vld [vmem:[%s1576] sm:$0xff]
        %v1579 = vsel %vm299, %v1544, 0
        %v1582 = vsel %vm299, %v1545, 0
        %v1585 = vsel %vm299, %v1546, 0
        %v1588 = vsel %vm299, %v1547, 0
        %v1591 = vsel %vm299, %v1548, 0
        %v1594 = vsel %vm299, %v1549, 0
        %v1597 = vsel %vm299, %v1550, 0
        %v1600 = vsel %vm299, %v1551, 0
        %v1603 = vsel %vm299, %v1552, 0
        %v1606 = vsel %vm299, %v1553, 0
        %v1609 = vsel %vm299, %v1554, 0
        %v1612 = vsel %vm299, %v1555, 0
        %v1615 = vsel %vm299, %v1556, 0
        %v1618 = vsel %vm299, %v1557, 0
        %v1621 = vsel %vm299, %v1558, 0
        %v1624 = vsel %vm299, %v1559, 0
        %v1627 = vsel %vm299, %v1560, 0
        %v1630 = vsel %vm299, %v1561, 0
        %v1633 = vsel %vm299, %v1562, 0
        %v1636 = vsel %vm299, %v1563, 0
        %v1639 = vsel %vm299, %v1564, 0
        %v1642 = vsel %vm299, %v1565, 0
        %v1645 = vsel %vm299, %v1566, 0
        %v1648 = vsel %vm299, %v1567, 0
        %v1651 = vsel %vm299, %v1568, 0
        %v1654 = vsel %vm299, %v1569, 0
        %v1657 = vsel %vm299, %v1570, 0
        %v1660 = vsel %vm299, %v1571, 0
        %v1663 = vsel %vm299, %v1572, 0
        %v1666 = vsel %vm299, %v1573, 0
        %v1669 = vsel %vm299, %v1574, 0
        %v1672 = vsel %vm299, %v1575, 0
        %1674 = vmatpush.msra.mxu0 0.0
        %1675 = vmatpush.msra.mxu0 0.0
        %1676 = vmatpush.msra.mxu0 0.0
        %1677 = vmatpush.msra.mxu0 0.0
        %1678 = vmatpush.msra.mxu0 0.0
        %1679 = vmatpush.msra.mxu0 0.0
        %1680 = vmatpush.msra.mxu0 0.0
        %1681 = vmatpush.msra.mxu0 0.0
        %1682 = vmatpush.msra.mxu0 0.0
        %1683 = vmatpush.msra.mxu0 0.0
        %1684 = vmatpush.msra.mxu0 0.0
        %1685 = vmatpush.msra.mxu0 0.0
        %1686 = vmatpush.msra.mxu0 0.0
        %1687 = vmatpush.msra.mxu0 0.0
        %1688 = vmatpush.msra.mxu0 0.0
        %1689 = vmatpush.msra.mxu0 %v1577
        %1690 = vmatmul.f32.gmra.mxu0 %v1579
        %v1691 = vpop.f32.mrf.mxu0
        %v1692 = vadd.f32 0.0, %v1691
        %1693 = vmatmul.f32.gmra.mxu0 %v1582
        %v1694 = vpop.f32.mrf.mxu0
        %v1695 = vadd.f32 0.0, %v1694
        %1696 = vmatmul.f32.gmra.mxu0 %v1585
        %v1697 = vpop.f32.mrf.mxu0
        %v1698 = vadd.f32 0.0, %v1697
        %1699 = vmatmul.f32.gmra.mxu0 %v1588
        %v1700 = vpop.f32.mrf.mxu0
        %v1701 = vadd.f32 0.0, %v1700
        %1702 = vmatmul.f32.gmra.mxu0 %v1591
        %v1703 = vpop.f32.mrf.mxu0
        %v1704 = vadd.f32 0.0, %v1703
        %1705 = vmatmul.f32.gmra.mxu0 %v1594
        %v1706 = vpop.f32.mrf.mxu0
        %v1707 = vadd.f32 0.0, %v1706
        %1708 = vmatmul.f32.gmra.mxu0 %v1597
        %v1709 = vpop.f32.mrf.mxu0
        %v1710 = vadd.f32 0.0, %v1709
        %1711 = vmatmul.f32.gmra.mxu0 %v1600
        %v1712 = vpop.f32.mrf.mxu0
        %v1713 = vadd.f32 0.0, %v1712
        %1714 = vmatmul.f32.gmra.mxu0 %v1603
        %v1715 = vpop.f32.mrf.mxu0
        %v1716 = vadd.f32 0.0, %v1715
        %1717 = vmatmul.f32.gmra.mxu0 %v1606
        %v1718 = vpop.f32.mrf.mxu0
        %v1719 = vadd.f32 0.0, %v1718
        %1720 = vmatmul.f32.gmra.mxu0 %v1609
        %v1721 = vpop.f32.mrf.mxu0
        %v1722 = vadd.f32 0.0, %v1721
        %1723 = vmatmul.f32.gmra.mxu0 %v1612
        %v1724 = vpop.f32.mrf.mxu0
        %v1725 = vadd.f32 0.0, %v1724
        %1726 = vmatmul.f32.gmra.mxu0 %v1615
        %v1727 = vpop.f32.mrf.mxu0
        %v1728 = vadd.f32 0.0, %v1727
        %1729 = vmatmul.f32.gmra.mxu0 %v1618
        %v1730 = vpop.f32.mrf.mxu0
        %v1731 = vadd.f32 0.0, %v1730
        %1732 = vmatmul.f32.gmra.mxu0 %v1621
        %v1733 = vpop.f32.mrf.mxu0
        %v1734 = vadd.f32 0.0, %v1733
        %1735 = vmatmul.f32.gmra.mxu0 %v1624
        %v1736 = vpop.f32.mrf.mxu0
        %v1737 = vadd.f32 0.0, %v1736
        %1738 = vmatmul.f32.gmra.mxu0 %v1627
        %v1739 = vpop.f32.mrf.mxu0
        %v1740 = vadd.f32 0.0, %v1739
        %1741 = vmatmul.f32.gmra.mxu0 %v1630
        %v1742 = vpop.f32.mrf.mxu0
        %v1743 = vadd.f32 0.0, %v1742
        %1744 = vmatmul.f32.gmra.mxu0 %v1633
        %v1745 = vpop.f32.mrf.mxu0
        %v1746 = vadd.f32 0.0, %v1745
        %1747 = vmatmul.f32.gmra.mxu0 %v1636
        %v1748 = vpop.f32.mrf.mxu0
        %v1749 = vadd.f32 0.0, %v1748
        %1750 = vmatmul.f32.gmra.mxu0 %v1639
        %v1751 = vpop.f32.mrf.mxu0
        %v1752 = vadd.f32 0.0, %v1751
        %1753 = vmatmul.f32.gmra.mxu0 %v1642
        %v1754 = vpop.f32.mrf.mxu0
        %v1755 = vadd.f32 0.0, %v1754
        %1756 = vmatmul.f32.gmra.mxu0 %v1645
        %v1757 = vpop.f32.mrf.mxu0
        %v1758 = vadd.f32 0.0, %v1757
        %1759 = vmatmul.f32.gmra.mxu0 %v1648
        %v1760 = vpop.f32.mrf.mxu0
        %v1761 = vadd.f32 0.0, %v1760
        %1762 = vmatmul.f32.gmra.mxu0 %v1651
        %v1763 = vpop.f32.mrf.mxu0
        %v1764 = vadd.f32 0.0, %v1763
        %1765 = vmatmul.f32.gmra.mxu0 %v1654
        %v1766 = vpop.f32.mrf.mxu0
        %v1767 = vadd.f32 0.0, %v1766
        %1768 = vmatmul.f32.gmra.mxu0 %v1657
        %v1769 = vpop.f32.mrf.mxu0
        %v1770 = vadd.f32 0.0, %v1769
        %1771 = vmatmul.f32.gmra.mxu0 %v1660
        %v1772 = vpop.f32.mrf.mxu0
        %v1773 = vadd.f32 0.0, %v1772
        %1774 = vmatmul.f32.gmra.mxu0 %v1663
        %v1775 = vpop.f32.mrf.mxu0
        %v1776 = vadd.f32 0.0, %v1775
        %1777 = vmatmul.f32.gmra.mxu0 %v1666
        %v1778 = vpop.f32.mrf.mxu0
        %v1779 = vadd.f32 0.0, %v1778
        %1780 = vmatmul.f32.gmra.mxu0 %v1669
        %v1781 = vpop.f32.mrf.mxu0
        %v1782 = vadd.f32 0.0, %v1781
        %1783 = vmatmul.f32.gmra.mxu0 %v1672
        %v1784 = vpop.f32.mrf.mxu0
        %v1785 = vadd.f32 0.0, %v1784
        %1786 = vdwg.mxu0
        %v1787 = vadd.f32 %v1512, %v1692
        %v1788 = vadd.f32 %v1513, %v1695
        %v1789 = vadd.f32 %v1514, %v1698
        %v1790 = vadd.f32 %v1515, %v1701
        %v1791 = vadd.f32 %v1516, %v1704
        %v1792 = vadd.f32 %v1517, %v1707
        %v1793 = vadd.f32 %v1518, %v1710
        %v1794 = vadd.f32 %v1519, %v1713
        %v1795 = vadd.f32 %v1520, %v1716
        %v1796 = vadd.f32 %v1521, %v1719
        %v1797 = vadd.f32 %v1522, %v1722
        %v1798 = vadd.f32 %v1523, %v1725
        %v1799 = vadd.f32 %v1524, %v1728
        %v1800 = vadd.f32 %v1525, %v1731
        %v1801 = vadd.f32 %v1526, %v1734
        %v1802 = vadd.f32 %v1527, %v1737
        %v1803 = vadd.f32 %v1528, %v1740
        %v1804 = vadd.f32 %v1529, %v1743
        %v1805 = vadd.f32 %v1530, %v1746
        %v1806 = vadd.f32 %v1531, %v1749
        %v1807 = vadd.f32 %v1532, %v1752
        %v1808 = vadd.f32 %v1533, %v1755
        %v1809 = vadd.f32 %v1534, %v1758
        %v1810 = vadd.f32 %v1535, %v1761
        %v1811 = vadd.f32 %v1536, %v1764
        %v1812 = vadd.f32 %v1537, %v1767
        %v1813 = vadd.f32 %v1538, %v1770
        %v1814 = vadd.f32 %v1539, %v1773
        %v1815 = vadd.f32 %v1540, %v1776
        %v1816 = vadd.f32 %v1541, %v1779
        %v1817 = vadd.f32 %v1542, %v1782
        %v1818 = vadd.f32 %v1543, %v1785
        %s1819 = scalar_lea.vmem %s228, 48
        %v1820 = vld [vmem:[%s1819] sm:$0xff]
        %v1821 = vld [vmem:[%s1819 + $0x8] sm:$0xff]
        %v1822 = vld [vmem:[%s1819 + $0x18] sm:$0xff]
        %v1823 = vld [vmem:[%s1819 + $0x20] sm:$0xff]
        %v1824 = vld [vmem:[%s1819 + $0x30] sm:$0xff]
        %v1825 = vld [vmem:[%s1819 + $0x38] sm:$0xff]
        %v1826 = vld [vmem:[%s1819 + $0x48] sm:$0xff]
        %v1827 = vld [vmem:[%s1819 + $0x50] sm:$0xff]
        %v1828 = vld [vmem:[%s1819 + $0x60] sm:$0xff]
        %v1829 = vld [vmem:[%s1819 + $0x68] sm:$0xff]
        %v1830 = vld [vmem:[%s1819 + $0x78] sm:$0xff]
        %v1831 = vld [vmem:[%s1819 + $0x80] sm:$0xff]
        %v1832 = vld [vmem:[%s1819 + $0x90] sm:$0xff]
        %v1833 = vld [vmem:[%s1819 + $0x98] sm:$0xff]
        %v1834 = vld [vmem:[%s1819 + $0xa8] sm:$0xff]
        %v1835 = vld [vmem:[%s1819 + $0xb0] sm:$0xff]
        %v1836 = vld [vmem:[%s1819 + $0xc0] sm:$0xff]
        %v1837 = vld [vmem:[%s1819 + $0xc8] sm:$0xff]
        %v1838 = vld [vmem:[%s1819 + $0xd8] sm:$0xff]
        %v1839 = vld [vmem:[%s1819 + $0xe0] sm:$0xff]
        %v1840 = vld [vmem:[%s1819 + $0xf0] sm:$0xff]
        %v1841 = vld [vmem:[%s1819 + $0xf8] sm:$0xff]
        %v1842 = vld [vmem:[%s1819 + $0x108] sm:$0xff]
        %v1843 = vld [vmem:[%s1819 + $0x110] sm:$0xff]
        %v1844 = vld [vmem:[%s1819 + $0x120] sm:$0xff]
        %v1845 = vld [vmem:[%s1819 + $0x128] sm:$0xff]
        %v1846 = vld [vmem:[%s1819 + $0x138] sm:$0xff]
        %v1847 = vld [vmem:[%s1819 + $0x140] sm:$0xff]
        %v1848 = vld [vmem:[%s1819 + $0x150] sm:$0xff]
        %v1849 = vld [vmem:[%s1819 + $0x158] sm:$0xff]
        %v1850 = vld [vmem:[%s1819 + $0x168] sm:$0xff]
        %v1851 = vld [vmem:[%s1819 + $0x170] sm:$0xff]
        %s1852 = scalar_lea.vmem %s1, 48
        %v1853 = vld [vmem:[%s1852] sm:$0xff]
        %v1855 = vsel %vm299, %v1820, 0
        %v1858 = vsel %vm299, %v1821, 0
        %v1861 = vsel %vm299, %v1822, 0
        %v1864 = vsel %vm299, %v1823, 0
        %v1867 = vsel %vm299, %v1824, 0
        %v1870 = vsel %vm299, %v1825, 0
        %v1873 = vsel %vm299, %v1826, 0
        %v1876 = vsel %vm299, %v1827, 0
        %v1879 = vsel %vm299, %v1828, 0
        %v1882 = vsel %vm299, %v1829, 0
        %v1885 = vsel %vm299, %v1830, 0
        %v1888 = vsel %vm299, %v1831, 0
        %v1891 = vsel %vm299, %v1832, 0
        %v1894 = vsel %vm299, %v1833, 0
        %v1897 = vsel %vm299, %v1834, 0
        %v1900 = vsel %vm299, %v1835, 0
        %v1903 = vsel %vm299, %v1836, 0
        %v1906 = vsel %vm299, %v1837, 0
        %v1909 = vsel %vm299, %v1838, 0
        %v1912 = vsel %vm299, %v1839, 0
        %v1915 = vsel %vm299, %v1840, 0
        %v1918 = vsel %vm299, %v1841, 0
        %v1921 = vsel %vm299, %v1842, 0
        %v1924 = vsel %vm299, %v1843, 0
        %v1927 = vsel %vm299, %v1844, 0
        %v1930 = vsel %vm299, %v1845, 0
        %v1933 = vsel %vm299, %v1846, 0
        %v1936 = vsel %vm299, %v1847, 0
        %v1939 = vsel %vm299, %v1848, 0
        %v1942 = vsel %vm299, %v1849, 0
        %v1945 = vsel %vm299, %v1850, 0
        %v1948 = vsel %vm299, %v1851, 0
        %1950 = vmatpush.msra.mxu0 0.0
        %1951 = vmatpush.msra.mxu0 0.0
        %1952 = vmatpush.msra.mxu0 0.0
        %1953 = vmatpush.msra.mxu0 0.0
        %1954 = vmatpush.msra.mxu0 0.0
        %1955 = vmatpush.msra.mxu0 0.0
        %1956 = vmatpush.msra.mxu0 0.0
        %1957 = vmatpush.msra.mxu0 0.0
        %1958 = vmatpush.msra.mxu0 0.0
        %1959 = vmatpush.msra.mxu0 0.0
        %1960 = vmatpush.msra.mxu0 0.0
        %1961 = vmatpush.msra.mxu0 0.0
        %1962 = vmatpush.msra.mxu0 0.0
        %1963 = vmatpush.msra.mxu0 0.0
        %1964 = vmatpush.msra.mxu0 0.0
        %1965 = vmatpush.msra.mxu0 %v1853
        %1966 = vmatmul.f32.gmra.mxu0 %v1855
        %v1967 = vpop.f32.mrf.mxu0
        %v1968 = vadd.f32 0.0, %v1967
        %1969 = vmatmul.f32.gmra.mxu0 %v1858
        %v1970 = vpop.f32.mrf.mxu0
        %v1971 = vadd.f32 0.0, %v1970
        %1972 = vmatmul.f32.gmra.mxu0 %v1861
        %v1973 = vpop.f32.mrf.mxu0
        %v1974 = vadd.f32 0.0, %v1973
        %1975 = vmatmul.f32.gmra.mxu0 %v1864
        %v1976 = vpop.f32.mrf.mxu0
        %v1977 = vadd.f32 0.0, %v1976
        %1978 = vmatmul.f32.gmra.mxu0 %v1867
        %v1979 = vpop.f32.mrf.mxu0
        %v1980 = vadd.f32 0.0, %v1979
        %1981 = vmatmul.f32.gmra.mxu0 %v1870
        %v1982 = vpop.f32.mrf.mxu0
        %v1983 = vadd.f32 0.0, %v1982
        %1984 = vmatmul.f32.gmra.mxu0 %v1873
        %v1985 = vpop.f32.mrf.mxu0
        %v1986 = vadd.f32 0.0, %v1985
        %1987 = vmatmul.f32.gmra.mxu0 %v1876
        %v1988 = vpop.f32.mrf.mxu0
        %v1989 = vadd.f32 0.0, %v1988
        %1990 = vmatmul.f32.gmra.mxu0 %v1879
        %v1991 = vpop.f32.mrf.mxu0
        %v1992 = vadd.f32 0.0, %v1991
        %1993 = vmatmul.f32.gmra.mxu0 %v1882
        %v1994 = vpop.f32.mrf.mxu0
        %v1995 = vadd.f32 0.0, %v1994
        %1996 = vmatmul.f32.gmra.mxu0 %v1885
        %v1997 = vpop.f32.mrf.mxu0
        %v1998 = vadd.f32 0.0, %v1997
        %1999 = vmatmul.f32.gmra.mxu0 %v1888
        %v2000 = vpop.f32.mrf.mxu0
        %v2001 = vadd.f32 0.0, %v2000
        %2002 = vmatmul.f32.gmra.mxu0 %v1891
        %v2003 = vpop.f32.mrf.mxu0
        %v2004 = vadd.f32 0.0, %v2003
        %2005 = vmatmul.f32.gmra.mxu0 %v1894
        %v2006 = vpop.f32.mrf.mxu0
        %v2007 = vadd.f32 0.0, %v2006
        %2008 = vmatmul.f32.gmra.mxu0 %v1897
        %v2009 = vpop.f32.mrf.mxu0
        %v2010 = vadd.f32 0.0, %v2009
        %2011 = vmatmul.f32.gmra.mxu0 %v1900
        %v2012 = vpop.f32.mrf.mxu0
        %v2013 = vadd.f32 0.0, %v2012
        %2014 = vmatmul.f32.gmra.mxu0 %v1903
        %v2015 = vpop.f32.mrf.mxu0
        %v2016 = vadd.f32 0.0, %v2015
        %2017 = vmatmul.f32.gmra.mxu0 %v1906
        %v2018 = vpop.f32.mrf.mxu0
        %v2019 = vadd.f32 0.0, %v2018
        %2020 = vmatmul.f32.gmra.mxu0 %v1909
        %v2021 = vpop.f32.mrf.mxu0
        %v2022 = vadd.f32 0.0, %v2021
        %2023 = vmatmul.f32.gmra.mxu0 %v1912
        %v2024 = vpop.f32.mrf.mxu0
        %v2025 = vadd.f32 0.0, %v2024
        %2026 = vmatmul.f32.gmra.mxu0 %v1915
        %v2027 = vpop.f32.mrf.mxu0
        %v2028 = vadd.f32 0.0, %v2027
        %2029 = vmatmul.f32.gmra.mxu0 %v1918
        %v2030 = vpop.f32.mrf.mxu0
        %v2031 = vadd.f32 0.0, %v2030
        %2032 = vmatmul.f32.gmra.mxu0 %v1921
        %v2033 = vpop.f32.mrf.mxu0
        %v2034 = vadd.f32 0.0, %v2033
        %2035 = vmatmul.f32.gmra.mxu0 %v1924
        %v2036 = vpop.f32.mrf.mxu0
        %v2037 = vadd.f32 0.0, %v2036
        %2038 = vmatmul.f32.gmra.mxu0 %v1927
        %v2039 = vpop.f32.mrf.mxu0
        %v2040 = vadd.f32 0.0, %v2039
        %2041 = vmatmul.f32.gmra.mxu0 %v1930
        %v2042 = vpop.f32.mrf.mxu0
        %v2043 = vadd.f32 0.0, %v2042
        %2044 = vmatmul.f32.gmra.mxu0 %v1933
        %v2045 = vpop.f32.mrf.mxu0
        %v2046 = vadd.f32 0.0, %v2045
        %2047 = vmatmul.f32.gmra.mxu0 %v1936
        %v2048 = vpop.f32.mrf.mxu0
        %v2049 = vadd.f32 0.0, %v2048
        %2050 = vmatmul.f32.gmra.mxu0 %v1939
        %v2051 = vpop.f32.mrf.mxu0
        %v2052 = vadd.f32 0.0, %v2051
        %2053 = vmatmul.f32.gmra.mxu0 %v1942
        %v2054 = vpop.f32.mrf.mxu0
        %v2055 = vadd.f32 0.0, %v2054
        %2056 = vmatmul.f32.gmra.mxu0 %v1945
        %v2057 = vpop.f32.mrf.mxu0
        %v2058 = vadd.f32 0.0, %v2057
        %2059 = vmatmul.f32.gmra.mxu0 %v1948
        %v2060 = vpop.f32.mrf.mxu0
        %v2061 = vadd.f32 0.0, %v2060
        %2062 = vdwg.mxu0
        %v2063 = vadd.f32 %v1787, %v1968
        %v2064 = vadd.f32 %v1788, %v1971
        %v2065 = vadd.f32 %v1789, %v1974
        %v2066 = vadd.f32 %v1790, %v1977
        %v2067 = vadd.f32 %v1791, %v1980
        %v2068 = vadd.f32 %v1792, %v1983
        %v2069 = vadd.f32 %v1793, %v1986
        %v2070 = vadd.f32 %v1794, %v1989
        %v2071 = vadd.f32 %v1795, %v1992
        %v2072 = vadd.f32 %v1796, %v1995
        %v2073 = vadd.f32 %v1797, %v1998
        %v2074 = vadd.f32 %v1798, %v2001
        %v2075 = vadd.f32 %v1799, %v2004
        %v2076 = vadd.f32 %v1800, %v2007
        %v2077 = vadd.f32 %v1801, %v2010
        %v2078 = vadd.f32 %v1802, %v2013
        %v2079 = vadd.f32 %v1803, %v2016
        %v2080 = vadd.f32 %v1804, %v2019
        %v2081 = vadd.f32 %v1805, %v2022
        %v2082 = vadd.f32 %v1806, %v2025
        %v2083 = vadd.f32 %v1807, %v2028
        %v2084 = vadd.f32 %v1808, %v2031
        %v2085 = vadd.f32 %v1809, %v2034
        %v2086 = vadd.f32 %v1810, %v2037
        %v2087 = vadd.f32 %v1811, %v2040
        %v2088 = vadd.f32 %v1812, %v2043
        %v2089 = vadd.f32 %v1813, %v2046
        %v2090 = vadd.f32 %v1814, %v2049
        %v2091 = vadd.f32 %v1815, %v2052
        %v2092 = vadd.f32 %v1816, %v2055
        %v2093 = vadd.f32 %v1817, %v2058
        %v2094 = vadd.f32 %v1818, %v2061
        %v2095 = vld [vmem:[%s1819 + $0x1] sm:$0xff]
        %v2096 = vld [vmem:[%s1819 + $0x9] sm:$0xff]
        %v2097 = vld [vmem:[%s1819 + $0x19] sm:$0xff]
        %v2098 = vld [vmem:[%s1819 + $0x21] sm:$0xff]
        %v2099 = vld [vmem:[%s1819 + $0x31] sm:$0xff]
        %v2100 = vld [vmem:[%s1819 + $0x39] sm:$0xff]
        %v2101 = vld [vmem:[%s1819 + $0x49] sm:$0xff]
        %v2102 = vld [vmem:[%s1819 + $0x51] sm:$0xff]
        %v2103 = vld [vmem:[%s1819 + $0x61] sm:$0xff]
        %v2104 = vld [vmem:[%s1819 + $0x69] sm:$0xff]
        %v2105 = vld [vmem:[%s1819 + $0x79] sm:$0xff]
        %v2106 = vld [vmem:[%s1819 + $0x81] sm:$0xff]
        %v2107 = vld [vmem:[%s1819 + $0x91] sm:$0xff]
        %v2108 = vld [vmem:[%s1819 + $0x99] sm:$0xff]
        %v2109 = vld [vmem:[%s1819 + $0xa9] sm:$0xff]
        %v2110 = vld [vmem:[%s1819 + $0xb1] sm:$0xff]
        %v2111 = vld [vmem:[%s1819 + $0xc1] sm:$0xff]
        %v2112 = vld [vmem:[%s1819 + $0xc9] sm:$0xff]
        %v2113 = vld [vmem:[%s1819 + $0xd9] sm:$0xff]
        %v2114 = vld [vmem:[%s1819 + $0xe1] sm:$0xff]
        %v2115 = vld [vmem:[%s1819 + $0xf1] sm:$0xff]
        %v2116 = vld [vmem:[%s1819 + $0xf9] sm:$0xff]
        %v2117 = vld [vmem:[%s1819 + $0x109] sm:$0xff]
        %v2118 = vld [vmem:[%s1819 + $0x111] sm:$0xff]
        %v2119 = vld [vmem:[%s1819 + $0x121] sm:$0xff]
        %v2120 = vld [vmem:[%s1819 + $0x129] sm:$0xff]
        %v2121 = vld [vmem:[%s1819 + $0x139] sm:$0xff]
        %v2122 = vld [vmem:[%s1819 + $0x141] sm:$0xff]
        %v2123 = vld [vmem:[%s1819 + $0x151] sm:$0xff]
        %v2124 = vld [vmem:[%s1819 + $0x159] sm:$0xff]
        %v2125 = vld [vmem:[%s1819 + $0x169] sm:$0xff]
        %v2126 = vld [vmem:[%s1819 + $0x171] sm:$0xff]
        %s2127 = scalar_lea.vmem %s1, 56
        %v2128 = vld [vmem:[%s2127] sm:$0xff]
        %v2130 = vsel %vm299, %v2095, 0
        %v2133 = vsel %vm299, %v2096, 0
        %v2136 = vsel %vm299, %v2097, 0
        %v2139 = vsel %vm299, %v2098, 0
        %v2142 = vsel %vm299, %v2099, 0
        %v2145 = vsel %vm299, %v2100, 0
        %v2148 = vsel %vm299, %v2101, 0
        %v2151 = vsel %vm299, %v2102, 0
        %v2154 = vsel %vm299, %v2103, 0
        %v2157 = vsel %vm299, %v2104, 0
        %v2160 = vsel %vm299, %v2105, 0
        %v2163 = vsel %vm299, %v2106, 0
        %v2166 = vsel %vm299, %v2107, 0
        %v2169 = vsel %vm299, %v2108, 0
        %v2172 = vsel %vm299, %v2109, 0
        %v2175 = vsel %vm299, %v2110, 0
        %v2178 = vsel %vm299, %v2111, 0
        %v2181 = vsel %vm299, %v2112, 0
        %v2184 = vsel %vm299, %v2113, 0
        %v2187 = vsel %vm299, %v2114, 0
        %v2190 = vsel %vm299, %v2115, 0
        %v2193 = vsel %vm299, %v2116, 0
        %v2196 = vsel %vm299, %v2117, 0
        %v2199 = vsel %vm299, %v2118, 0
        %v2202 = vsel %vm299, %v2119, 0
        %v2205 = vsel %vm299, %v2120, 0
        %v2208 = vsel %vm299, %v2121, 0
        %v2211 = vsel %vm299, %v2122, 0
        %v2214 = vsel %vm299, %v2123, 0
        %v2217 = vsel %vm299, %v2124, 0
        %v2220 = vsel %vm299, %v2125, 0
        %v2223 = vsel %vm299, %v2126, 0
        %2225 = vmatpush.msra.mxu0 0.0
        %2226 = vmatpush.msra.mxu0 0.0
        %2227 = vmatpush.msra.mxu0 0.0
        %2228 = vmatpush.msra.mxu0 0.0
        %2229 = vmatpush.msra.mxu0 0.0
        %2230 = vmatpush.msra.mxu0 0.0
        %2231 = vmatpush.msra.mxu0 0.0
        %2232 = vmatpush.msra.mxu0 0.0
        %2233 = vmatpush.msra.mxu0 0.0
        %2234 = vmatpush.msra.mxu0 0.0
        %2235 = vmatpush.msra.mxu0 0.0
        %2236 = vmatpush.msra.mxu0 0.0
        %2237 = vmatpush.msra.mxu0 0.0
        %2238 = vmatpush.msra.mxu0 0.0
        %2239 = vmatpush.msra.mxu0 0.0
        %2240 = vmatpush.msra.mxu0 %v2128
        %2241 = vmatmul.f32.gmra.mxu0 %v2130
        %v2242 = vpop.f32.mrf.mxu0
        %v2243 = vadd.f32 0.0, %v2242
        %2244 = vmatmul.f32.gmra.mxu0 %v2133
        %v2245 = vpop.f32.mrf.mxu0
        %v2246 = vadd.f32 0.0, %v2245
        %2247 = vmatmul.f32.gmra.mxu0 %v2136
        %v2248 = vpop.f32.mrf.mxu0
        %v2249 = vadd.f32 0.0, %v2248
        %2250 = vmatmul.f32.gmra.mxu0 %v2139
        %v2251 = vpop.f32.mrf.mxu0
        %v2252 = vadd.f32 0.0, %v2251
        %2253 = vmatmul.f32.gmra.mxu0 %v2142
        %v2254 = vpop.f32.mrf.mxu0
        %v2255 = vadd.f32 0.0, %v2254
        %2256 = vmatmul.f32.gmra.mxu0 %v2145
        %v2257 = vpop.f32.mrf.mxu0
        %v2258 = vadd.f32 0.0, %v2257
        %2259 = vmatmul.f32.gmra.mxu0 %v2148
        %v2260 = vpop.f32.mrf.mxu0
        %v2261 = vadd.f32 0.0, %v2260
        %2262 = vmatmul.f32.gmra.mxu0 %v2151
        %v2263 = vpop.f32.mrf.mxu0
        %v2264 = vadd.f32 0.0, %v2263
        %2265 = vmatmul.f32.gmra.mxu0 %v2154
        %v2266 = vpop.f32.mrf.mxu0
        %v2267 = vadd.f32 0.0, %v2266
        %2268 = vmatmul.f32.gmra.mxu0 %v2157
        %v2269 = vpop.f32.mrf.mxu0
        %v2270 = vadd.f32 0.0, %v2269
        %2271 = vmatmul.f32.gmra.mxu0 %v2160
        %v2272 = vpop.f32.mrf.mxu0
        %v2273 = vadd.f32 0.0, %v2272
        %2274 = vmatmul.f32.gmra.mxu0 %v2163
        %v2275 = vpop.f32.mrf.mxu0
        %v2276 = vadd.f32 0.0, %v2275
        %2277 = vmatmul.f32.gmra.mxu0 %v2166
        %v2278 = vpop.f32.mrf.mxu0
        %v2279 = vadd.f32 0.0, %v2278
        %2280 = vmatmul.f32.gmra.mxu0 %v2169
        %v2281 = vpop.f32.mrf.mxu0
        %v2282 = vadd.f32 0.0, %v2281
        %2283 = vmatmul.f32.gmra.mxu0 %v2172
        %v2284 = vpop.f32.mrf.mxu0
        %v2285 = vadd.f32 0.0, %v2284
        %2286 = vmatmul.f32.gmra.mxu0 %v2175
        %v2287 = vpop.f32.mrf.mxu0
        %v2288 = vadd.f32 0.0, %v2287
        %2289 = vmatmul.f32.gmra.mxu0 %v2178
        %v2290 = vpop.f32.mrf.mxu0
        %v2291 = vadd.f32 0.0, %v2290
        %2292 = vmatmul.f32.gmra.mxu0 %v2181
        %v2293 = vpop.f32.mrf.mxu0
        %v2294 = vadd.f32 0.0, %v2293
        %2295 = vmatmul.f32.gmra.mxu0 %v2184
        %v2296 = vpop.f32.mrf.mxu0
        %v2297 = vadd.f32 0.0, %v2296
        %2298 = vmatmul.f32.gmra.mxu0 %v2187
        %v2299 = vpop.f32.mrf.mxu0
        %v2300 = vadd.f32 0.0, %v2299
        %2301 = vmatmul.f32.gmra.mxu0 %v2190
        %v2302 = vpop.f32.mrf.mxu0
        %v2303 = vadd.f32 0.0, %v2302
        %2304 = vmatmul.f32.gmra.mxu0 %v2193
        %v2305 = vpop.f32.mrf.mxu0
        %v2306 = vadd.f32 0.0, %v2305
        %2307 = vmatmul.f32.gmra.mxu0 %v2196
        %v2308 = vpop.f32.mrf.mxu0
        %v2309 = vadd.f32 0.0, %v2308
        %2310 = vmatmul.f32.gmra.mxu0 %v2199
        %v2311 = vpop.f32.mrf.mxu0
        %v2312 = vadd.f32 0.0, %v2311
        %2313 = vmatmul.f32.gmra.mxu0 %v2202
        %v2314 = vpop.f32.mrf.mxu0
        %v2315 = vadd.f32 0.0, %v2314
        %2316 = vmatmul.f32.gmra.mxu0 %v2205
        %v2317 = vpop.f32.mrf.mxu0
        %v2318 = vadd.f32 0.0, %v2317
        %2319 = vmatmul.f32.gmra.mxu0 %v2208
        %v2320 = vpop.f32.mrf.mxu0
        %v2321 = vadd.f32 0.0, %v2320
        %2322 = vmatmul.f32.gmra.mxu0 %v2211
        %v2323 = vpop.f32.mrf.mxu0
        %v2324 = vadd.f32 0.0, %v2323
        %2325 = vmatmul.f32.gmra.mxu0 %v2214
        %v2326 = vpop.f32.mrf.mxu0
        %v2327 = vadd.f32 0.0, %v2326
        %2328 = vmatmul.f32.gmra.mxu0 %v2217
        %v2329 = vpop.f32.mrf.mxu0
        %v2330 = vadd.f32 0.0, %v2329
        %2331 = vmatmul.f32.gmra.mxu0 %v2220
        %v2332 = vpop.f32.mrf.mxu0
        %v2333 = vadd.f32 0.0, %v2332
        %2334 = vmatmul.f32.gmra.mxu0 %v2223
        %v2335 = vpop.f32.mrf.mxu0
        %v2336 = vadd.f32 0.0, %v2335
        %2337 = vdwg.mxu0
        %v2338 = vadd.f32 %v2063, %v2243
        %v2339 = vadd.f32 %v2064, %v2246
        %v2340 = vadd.f32 %v2065, %v2249
        %v2341 = vadd.f32 %v2066, %v2252
        %v2342 = vadd.f32 %v2067, %v2255
        %v2343 = vadd.f32 %v2068, %v2258
        %v2344 = vadd.f32 %v2069, %v2261
        %v2345 = vadd.f32 %v2070, %v2264
        %v2346 = vadd.f32 %v2071, %v2267
        %v2347 = vadd.f32 %v2072, %v2270
        %v2348 = vadd.f32 %v2073, %v2273
        %v2349 = vadd.f32 %v2074, %v2276
        %v2350 = vadd.f32 %v2075, %v2279
        %v2351 = vadd.f32 %v2076, %v2282
        %v2352 = vadd.f32 %v2077, %v2285
        %v2353 = vadd.f32 %v2078, %v2288
        %v2354 = vadd.f32 %v2079, %v2291
        %v2355 = vadd.f32 %v2080, %v2294
        %v2356 = vadd.f32 %v2081, %v2297
        %v2357 = vadd.f32 %v2082, %v2300
        %v2358 = vadd.f32 %v2083, %v2303
        %v2359 = vadd.f32 %v2084, %v2306
        %v2360 = vadd.f32 %v2085, %v2309
        %v2361 = vadd.f32 %v2086, %v2312
        %v2362 = vadd.f32 %v2087, %v2315
        %v2363 = vadd.f32 %v2088, %v2318
        %v2364 = vadd.f32 %v2089, %v2321
        %v2365 = vadd.f32 %v2090, %v2324
        %v2366 = vadd.f32 %v2091, %v2327
        %v2367 = vadd.f32 %v2092, %v2330
        %v2368 = vadd.f32 %v2093, %v2333
        %v2369 = vadd.f32 %v2094, %v2336
        %v2370 = vld [vmem:[%s1819 + $0x2] sm:$0xff]
        %v2371 = vld [vmem:[%s1819 + $0xa] sm:$0xff]
        %v2372 = vld [vmem:[%s1819 + $0x1a] sm:$0xff]
        %v2373 = vld [vmem:[%s1819 + $0x22] sm:$0xff]
        %v2374 = vld [vmem:[%s1819 + $0x32] sm:$0xff]
        %v2375 = vld [vmem:[%s1819 + $0x3a] sm:$0xff]
        %v2376 = vld [vmem:[%s1819 + $0x4a] sm:$0xff]
        %v2377 = vld [vmem:[%s1819 + $0x52] sm:$0xff]
        %v2378 = vld [vmem:[%s1819 + $0x62] sm:$0xff]
        %v2379 = vld [vmem:[%s1819 + $0x6a] sm:$0xff]
        %v2380 = vld [vmem:[%s1819 + $0x7a] sm:$0xff]
        %v2381 = vld [vmem:[%s1819 + $0x82] sm:$0xff]
        %v2382 = vld [vmem:[%s1819 + $0x92] sm:$0xff]
        %v2383 = vld [vmem:[%s1819 + $0x9a] sm:$0xff]
        %v2384 = vld [vmem:[%s1819 + $0xaa] sm:$0xff]
        %v2385 = vld [vmem:[%s1819 + $0xb2] sm:$0xff]
        %v2386 = vld [vmem:[%s1819 + $0xc2] sm:$0xff]
        %v2387 = vld [vmem:[%s1819 + $0xca] sm:$0xff]
        %v2388 = vld [vmem:[%s1819 + $0xda] sm:$0xff]
        %v2389 = vld [vmem:[%s1819 + $0xe2] sm:$0xff]
        %v2390 = vld [vmem:[%s1819 + $0xf2] sm:$0xff]
        %v2391 = vld [vmem:[%s1819 + $0xfa] sm:$0xff]
        %v2392 = vld [vmem:[%s1819 + $0x10a] sm:$0xff]
        %v2393 = vld [vmem:[%s1819 + $0x112] sm:$0xff]
        %v2394 = vld [vmem:[%s1819 + $0x122] sm:$0xff]
        %v2395 = vld [vmem:[%s1819 + $0x12a] sm:$0xff]
        %v2396 = vld [vmem:[%s1819 + $0x13a] sm:$0xff]
        %v2397 = vld [vmem:[%s1819 + $0x142] sm:$0xff]
        %v2398 = vld [vmem:[%s1819 + $0x152] sm:$0xff]
        %v2399 = vld [vmem:[%s1819 + $0x15a] sm:$0xff]
        %v2400 = vld [vmem:[%s1819 + $0x16a] sm:$0xff]
        %v2401 = vld [vmem:[%s1819 + $0x172] sm:$0xff]
        %s2402 = scalar_lea.vmem %s1, 64
        %v2403 = vld [vmem:[%s2402] sm:$0xff]
        %v2405 = vsel %vm299, %v2370, 0
        %v2408 = vsel %vm299, %v2371, 0
        %v2411 = vsel %vm299, %v2372, 0
        %v2414 = vsel %vm299, %v2373, 0
        %v2417 = vsel %vm299, %v2374, 0
        %v2420 = vsel %vm299, %v2375, 0
        %v2423 = vsel %vm299, %v2376, 0
        %v2426 = vsel %vm299, %v2377, 0
        %v2429 = vsel %vm299, %v2378, 0
        %v2432 = vsel %vm299, %v2379, 0
        %v2435 = vsel %vm299, %v2380, 0
        %v2438 = vsel %vm299, %v2381, 0
        %v2441 = vsel %vm299, %v2382, 0
        %v2444 = vsel %vm299, %v2383, 0
        %v2447 = vsel %vm299, %v2384, 0
        %v2450 = vsel %vm299, %v2385, 0
        %v2453 = vsel %vm299, %v2386, 0
        %v2456 = vsel %vm299, %v2387, 0
        %v2459 = vsel %vm299, %v2388, 0
        %v2462 = vsel %vm299, %v2389, 0
        %v2465 = vsel %vm299, %v2390, 0
        %v2468 = vsel %vm299, %v2391, 0
        %v2471 = vsel %vm299, %v2392, 0
        %v2474 = vsel %vm299, %v2393, 0
        %v2477 = vsel %vm299, %v2394, 0
        %v2480 = vsel %vm299, %v2395, 0
        %v2483 = vsel %vm299, %v2396, 0
        %v2486 = vsel %vm299, %v2397, 0
        %v2489 = vsel %vm299, %v2398, 0
        %v2492 = vsel %vm299, %v2399, 0
        %v2495 = vsel %vm299, %v2400, 0
        %v2498 = vsel %vm299, %v2401, 0
        %2500 = vmatpush.msra.mxu0 0.0
        %2501 = vmatpush.msra.mxu0 0.0
        %2502 = vmatpush.msra.mxu0 0.0
        %2503 = vmatpush.msra.mxu0 0.0
        %2504 = vmatpush.msra.mxu0 0.0
        %2505 = vmatpush.msra.mxu0 0.0
        %2506 = vmatpush.msra.mxu0 0.0
        %2507 = vmatpush.msra.mxu0 0.0
        %2508 = vmatpush.msra.mxu0 0.0
        %2509 = vmatpush.msra.mxu0 0.0
        %2510 = vmatpush.msra.mxu0 0.0
        %2511 = vmatpush.msra.mxu0 0.0
        %2512 = vmatpush.msra.mxu0 0.0
        %2513 = vmatpush.msra.mxu0 0.0
        %2514 = vmatpush.msra.mxu0 0.0
        %2515 = vmatpush.msra.mxu0 %v2403
        %2516 = vmatmul.f32.gmra.mxu0 %v2405
        %v2517 = vpop.f32.mrf.mxu0
        %v2518 = vadd.f32 0.0, %v2517
        %2519 = vmatmul.f32.gmra.mxu0 %v2408
        %v2520 = vpop.f32.mrf.mxu0
        %v2521 = vadd.f32 0.0, %v2520
        %2522 = vmatmul.f32.gmra.mxu0 %v2411
        %v2523 = vpop.f32.mrf.mxu0
        %v2524 = vadd.f32 0.0, %v2523
        %2525 = vmatmul.f32.gmra.mxu0 %v2414
        %v2526 = vpop.f32.mrf.mxu0
        %v2527 = vadd.f32 0.0, %v2526
        %2528 = vmatmul.f32.gmra.mxu0 %v2417
        %v2529 = vpop.f32.mrf.mxu0
        %v2530 = vadd.f32 0.0, %v2529
        %2531 = vmatmul.f32.gmra.mxu0 %v2420
        %v2532 = vpop.f32.mrf.mxu0
        %v2533 = vadd.f32 0.0, %v2532
        %2534 = vmatmul.f32.gmra.mxu0 %v2423
        %v2535 = vpop.f32.mrf.mxu0
        %v2536 = vadd.f32 0.0, %v2535
        %2537 = vmatmul.f32.gmra.mxu0 %v2426
        %v2538 = vpop.f32.mrf.mxu0
        %v2539 = vadd.f32 0.0, %v2538
        %2540 = vmatmul.f32.gmra.mxu0 %v2429
        %v2541 = vpop.f32.mrf.mxu0
        %v2542 = vadd.f32 0.0, %v2541
        %2543 = vmatmul.f32.gmra.mxu0 %v2432
        %v2544 = vpop.f32.mrf.mxu0
        %v2545 = vadd.f32 0.0, %v2544
        %2546 = vmatmul.f32.gmra.mxu0 %v2435
        %v2547 = vpop.f32.mrf.mxu0
        %v2548 = vadd.f32 0.0, %v2547
        %2549 = vmatmul.f32.gmra.mxu0 %v2438
        %v2550 = vpop.f32.mrf.mxu0
        %v2551 = vadd.f32 0.0, %v2550
        %2552 = vmatmul.f32.gmra.mxu0 %v2441
        %v2553 = vpop.f32.mrf.mxu0
        %v2554 = vadd.f32 0.0, %v2553
        %2555 = vmatmul.f32.gmra.mxu0 %v2444
        %v2556 = vpop.f32.mrf.mxu0
        %v2557 = vadd.f32 0.0, %v2556
        %2558 = vmatmul.f32.gmra.mxu0 %v2447
        %v2559 = vpop.f32.mrf.mxu0
        %v2560 = vadd.f32 0.0, %v2559
        %2561 = vmatmul.f32.gmra.mxu0 %v2450
        %v2562 = vpop.f32.mrf.mxu0
        %v2563 = vadd.f32 0.0, %v2562
        %2564 = vmatmul.f32.gmra.mxu0 %v2453
        %v2565 = vpop.f32.mrf.mxu0
        %v2566 = vadd.f32 0.0, %v2565
        %2567 = vmatmul.f32.gmra.mxu0 %v2456
        %v2568 = vpop.f32.mrf.mxu0
        %v2569 = vadd.f32 0.0, %v2568
        %2570 = vmatmul.f32.gmra.mxu0 %v2459
        %v2571 = vpop.f32.mrf.mxu0
        %v2572 = vadd.f32 0.0, %v2571
        %2573 = vmatmul.f32.gmra.mxu0 %v2462
        %v2574 = vpop.f32.mrf.mxu0
        %v2575 = vadd.f32 0.0, %v2574
        %2576 = vmatmul.f32.gmra.mxu0 %v2465
        %v2577 = vpop.f32.mrf.mxu0
        %v2578 = vadd.f32 0.0, %v2577
        %2579 = vmatmul.f32.gmra.mxu0 %v2468
        %v2580 = vpop.f32.mrf.mxu0
        %v2581 = vadd.f32 0.0, %v2580
        %2582 = vmatmul.f32.gmra.mxu0 %v2471
        %v2583 = vpop.f32.mrf.mxu0
        %v2584 = vadd.f32 0.0, %v2583
        %2585 = vmatmul.f32.gmra.mxu0 %v2474
        %v2586 = vpop.f32.mrf.mxu0
        %v2587 = vadd.f32 0.0, %v2586
        %2588 = vmatmul.f32.gmra.mxu0 %v2477
        %v2589 = vpop.f32.mrf.mxu0
        %v2590 = vadd.f32 0.0, %v2589
        %2591 = vmatmul.f32.gmra.mxu0 %v2480
        %v2592 = vpop.f32.mrf.mxu0
        %v2593 = vadd.f32 0.0, %v2592
        %2594 = vmatmul.f32.gmra.mxu0 %v2483
        %v2595 = vpop.f32.mrf.mxu0
        %v2596 = vadd.f32 0.0, %v2595
        %2597 = vmatmul.f32.gmra.mxu0 %v2486
        %v2598 = vpop.f32.mrf.mxu0
        %v2599 = vadd.f32 0.0, %v2598
        %2600 = vmatmul.f32.gmra.mxu0 %v2489
        %v2601 = vpop.f32.mrf.mxu0
        %v2602 = vadd.f32 0.0, %v2601
        %2603 = vmatmul.f32.gmra.mxu0 %v2492
        %v2604 = vpop.f32.mrf.mxu0
        %v2605 = vadd.f32 0.0, %v2604
        %2606 = vmatmul.f32.gmra.mxu0 %v2495
        %v2607 = vpop.f32.mrf.mxu0
        %v2608 = vadd.f32 0.0, %v2607
        %2609 = vmatmul.f32.gmra.mxu0 %v2498
        %v2610 = vpop.f32.mrf.mxu0
        %v2611 = vadd.f32 0.0, %v2610
        %2612 = vdwg.mxu0
        %v2613 = vadd.f32 %v2338, %v2518
        %v2614 = vadd.f32 %v2339, %v2521
        %v2615 = vadd.f32 %v2340, %v2524
        %v2616 = vadd.f32 %v2341, %v2527
        %v2617 = vadd.f32 %v2342, %v2530
        %v2618 = vadd.f32 %v2343, %v2533
        %v2619 = vadd.f32 %v2344, %v2536
        %v2620 = vadd.f32 %v2345, %v2539
        %v2621 = vadd.f32 %v2346, %v2542
        %v2622 = vadd.f32 %v2347, %v2545
        %v2623 = vadd.f32 %v2348, %v2548
        %v2624 = vadd.f32 %v2349, %v2551
        %v2625 = vadd.f32 %v2350, %v2554
        %v2626 = vadd.f32 %v2351, %v2557
        %v2627 = vadd.f32 %v2352, %v2560
        %v2628 = vadd.f32 %v2353, %v2563
        %v2629 = vadd.f32 %v2354, %v2566
        %v2630 = vadd.f32 %v2355, %v2569
        %v2631 = vadd.f32 %v2356, %v2572
        %v2632 = vadd.f32 %v2357, %v2575
        %v2633 = vadd.f32 %v2358, %v2578
        %v2634 = vadd.f32 %v2359, %v2581
        %v2635 = vadd.f32 %v2360, %v2584
        %v2636 = vadd.f32 %v2361, %v2587
        %v2637 = vadd.f32 %v2362, %v2590
        %v2638 = vadd.f32 %v2363, %v2593
        %v2639 = vadd.f32 %v2364, %v2596
        %v2640 = vadd.f32 %v2365, %v2599
        %v2641 = vadd.f32 %v2366, %v2602
        %v2642 = vadd.f32 %v2367, %v2605
        %v2643 = vadd.f32 %v2368, %v2608
        %v2644 = vadd.f32 %v2369, %v2611
        %v2645 = vld [vmem:[%s2] sm:$0x1]
        %v2647 = vperm.slane %v2645, 0
        %v2649 = vadd.f32 %v2613, %v2647
        %v2650 = vadd.f32 %v2614, %v2647
        %v2651 = vadd.f32 %v2615, %v2647
        %v2652 = vadd.f32 %v2616, %v2647
        %v2653 = vadd.f32 %v2617, %v2647
        %v2654 = vadd.f32 %v2618, %v2647
        %v2655 = vadd.f32 %v2619, %v2647
        %v2656 = vadd.f32 %v2620, %v2647
        %v2657 = vadd.f32 %v2621, %v2647
        %v2658 = vadd.f32 %v2622, %v2647
        %v2659 = vadd.f32 %v2623, %v2647
        %v2660 = vadd.f32 %v2624, %v2647
        %v2661 = vadd.f32 %v2625, %v2647
        %v2662 = vadd.f32 %v2626, %v2647
        %v2663 = vadd.f32 %v2627, %v2647
        %v2664 = vadd.f32 %v2628, %v2647
        %v2665 = vadd.f32 %v2629, %v2647
        %v2666 = vadd.f32 %v2630, %v2647
        %v2667 = vadd.f32 %v2631, %v2647
        %v2668 = vadd.f32 %v2632, %v2647
        %v2669 = vadd.f32 %v2633, %v2647
        %v2670 = vadd.f32 %v2634, %v2647
        %v2671 = vadd.f32 %v2635, %v2647
        %v2672 = vadd.f32 %v2636, %v2647
        %v2673 = vadd.f32 %v2637, %v2647
        %v2674 = vadd.f32 %v2638, %v2647
        %v2675 = vadd.f32 %v2639, %v2647
        %v2676 = vadd.f32 %v2640, %v2647
        %v2677 = vadd.f32 %v2641, %v2647
        %v2678 = vadd.f32 %v2642, %v2647
        %v2679 = vadd.f32 %v2643, %v2647
        %v2680 = vadd.f32 %v2644, %v2647
        %v2681 = vadd.f32 %v2649, %v2650
        %v2682 = vadd.f32 %v2681, %v2651
        %v2683 = vadd.f32 %v2682, %v2652
        %v2684 = vadd.f32 %v2683, %v2653
        %v2685 = vadd.f32 %v2684, %v2654
        %v2686 = vadd.f32 %v2685, %v2655
        %v2687 = vadd.f32 %v2686, %v2656
        %v2688 = vadd.f32 %v2687, %v2657
        %v2689 = vadd.f32 %v2688, %v2658
        %v2690 = vadd.f32 %v2689, %v2659
        %v2691 = vadd.f32 %v2690, %v2660
        %v2692 = vadd.f32 %v2691, %v2661
        %v2693 = vadd.f32 %v2692, %v2662
        %v2694 = vadd.f32 %v2693, %v2663
        %v2695 = vadd.f32 %v2694, %v2664
        %v2696 = vadd.f32 %v2695, %v2665
        %v2697 = vadd.f32 %v2696, %v2666
        %v2698 = vadd.f32 %v2697, %v2667
        %v2699 = vadd.f32 %v2698, %v2668
        %v2700 = vadd.f32 %v2699, %v2669
        %v2701 = vadd.f32 %v2700, %v2670
        %v2702 = vadd.f32 %v2701, %v2671
        %v2703 = vadd.f32 %v2702, %v2672
        %v2704 = vadd.f32 %v2703, %v2673
        %v2705 = vadd.f32 %v2704, %v2674
        %v2706 = vadd.f32 %v2705, %v2675
        %v2707 = vadd.f32 %v2706, %v2676
        %v2708 = vadd.f32 %v2707, %v2677
        %v2709 = vadd.f32 %v2708, %v2678
        %v2710 = vadd.f32 %v2709, %v2679
        %v2711 = vadd.f32 %v2710, %v2680
        %v2712 = vrot.slane %v2711, 4
        %v2713 = vadd.f32 %v2711, %v2712
        %v2714 = vrot.slane %v2713, 2
        %v2715 = vadd.f32 %v2713, %v2714
        %v2716 = vrot.slane %v2715, 1
        %v2717 = vadd.f32 %v2715, %v2716
        %v2718 = vmul.f32 %v2649, %v2649
        %v2719 = vmul.f32 %v2650, %v2650
        %v2720 = vmul.f32 %v2651, %v2651
        %v2721 = vmul.f32 %v2652, %v2652
        %v2722 = vmul.f32 %v2653, %v2653
        %v2723 = vmul.f32 %v2654, %v2654
        %v2724 = vmul.f32 %v2655, %v2655
        %v2725 = vmul.f32 %v2656, %v2656
        %v2726 = vmul.f32 %v2657, %v2657
        %v2727 = vmul.f32 %v2658, %v2658
        %v2728 = vmul.f32 %v2659, %v2659
        %v2729 = vmul.f32 %v2660, %v2660
        %v2730 = vmul.f32 %v2661, %v2661
        %v2731 = vmul.f32 %v2662, %v2662
        %v2732 = vmul.f32 %v2663, %v2663
        %v2733 = vmul.f32 %v2664, %v2664
        %v2734 = vmul.f32 %v2665, %v2665
        %v2735 = vmul.f32 %v2666, %v2666
        %v2736 = vmul.f32 %v2667, %v2667
        %v2737 = vmul.f32 %v2668, %v2668
        %v2738 = vmul.f32 %v2669, %v2669
        %v2739 = vmul.f32 %v2670, %v2670
        %v2740 = vmul.f32 %v2671, %v2671
        %v2741 = vmul.f32 %v2672, %v2672
        %v2742 = vmul.f32 %v2673, %v2673
        %v2743 = vmul.f32 %v2674, %v2674
        %v2744 = vmul.f32 %v2675, %v2675
        %v2745 = vmul.f32 %v2676, %v2676
        %v2746 = vmul.f32 %v2677, %v2677
        %v2747 = vmul.f32 %v2678, %v2678
        %v2748 = vmul.f32 %v2679, %v2679
        %v2749 = vmul.f32 %v2680, %v2680
        %v2750 = vadd.f32 %v2718, %v2719
        %v2751 = vadd.f32 %v2750, %v2720
        %v2752 = vadd.f32 %v2751, %v2721
        %v2753 = vadd.f32 %v2752, %v2722
        %v2754 = vadd.f32 %v2753, %v2723
        %v2755 = vadd.f32 %v2754, %v2724
        %v2756 = vadd.f32 %v2755, %v2725
        %v2757 = vadd.f32 %v2756, %v2726
        %v2758 = vadd.f32 %v2757, %v2727
        %v2759 = vadd.f32 %v2758, %v2728
        %v2760 = vadd.f32 %v2759, %v2729
        %v2761 = vadd.f32 %v2760, %v2730
        %v2762 = vadd.f32 %v2761, %v2731
        %v2763 = vadd.f32 %v2762, %v2732
        %v2764 = vadd.f32 %v2763, %v2733
        %v2765 = vadd.f32 %v2764, %v2734
        %v2766 = vadd.f32 %v2765, %v2735
        %v2767 = vadd.f32 %v2766, %v2736
        %v2768 = vadd.f32 %v2767, %v2737
        %v2769 = vadd.f32 %v2768, %v2738
        %v2770 = vadd.f32 %v2769, %v2739
        %v2771 = vadd.f32 %v2770, %v2740
        %v2772 = vadd.f32 %v2771, %v2741
        %v2773 = vadd.f32 %v2772, %v2742
        %v2774 = vadd.f32 %v2773, %v2743
        %v2775 = vadd.f32 %v2774, %v2744
        %v2776 = vadd.f32 %v2775, %v2745
        %v2777 = vadd.f32 %v2776, %v2746
        %v2778 = vadd.f32 %v2777, %v2747
        %v2779 = vadd.f32 %v2778, %v2748
        %v2780 = vadd.f32 %v2779, %v2749
        %v2781 = vrot.slane %v2780, 4
        %v2782 = vadd.f32 %v2780, %v2781
        %v2783 = vrot.slane %v2782, 2
        %v2784 = vadd.f32 %v2782, %v2783
        %v2785 = vrot.slane %v2784, 1
        %v2786 = vadd.f32 %v2784, %v2785
        %vm2787 = vcmask 1040384
        %v2788 = vsel %vm2787, %v2717, %v2786
        %2789 = vst [vmem:[%s222] sm:$0x3] %v2788
        %2790 = vxpose.xlu0.b32.start [1/16] %v2649, 128
        %2791 = vxpose.xlu0.b32.cont [2/16] %v2650, 128
        %2792 = vxpose.xlu0.b32.cont [3/16] %v2651, 128
        %2793 = vxpose.xlu0.b32.cont [4/16] %v2652, 128
        %2794 = vxpose.xlu0.b32.cont [5/16] %v2653, 128
        %2795 = vxpose.xlu0.b32.cont [6/16] %v2654, 128
        %2796 = vxpose.xlu0.b32.cont [7/16] %v2655, 128
        %2797 = vxpose.xlu0.b32.cont [8/16] %v2656, 128
        %2798 = vxpose.xlu0.b32.cont [9/16] %v2657, 128
        %2799 = vxpose.xlu0.b32.cont [10/16] %v2658, 128
        %2800 = vxpose.xlu0.b32.cont [11/16] %v2659, 128
        %2801 = vxpose.xlu0.b32.cont [12/16] %v2660, 128
        %2802 = vxpose.xlu0.b32.cont [13/16] %v2661, 128
        %2803 = vxpose.xlu0.b32.cont [14/16] %v2662, 128
        %2804 = vxpose.xlu0.b32.cont [15/16] %v2663, 128
        %2805 = vxpose.xlu0.b32.end [16/16] %v2664, 128
        %v2806 = vpop.trf.xlu0
        %v2807 = vpop.trf.xlu0
        %v2808 = vpop.trf.xlu0
        %v2809 = vpop.trf.xlu0
        %v2810 = vpop.trf.xlu0
        %v2811 = vpop.trf.xlu0
        %v2812 = vpop.trf.xlu0
        %v2813 = vpop.trf.xlu0
        %v2814 = vpop.trf.xlu0
        %v2815 = vpop.trf.xlu0
        %v2816 = vpop.trf.xlu0
        %v2817 = vpop.trf.xlu0
        %v2818 = vpop.trf.xlu0
        %v2819 = vpop.trf.xlu0
        %v2820 = vpop.trf.xlu0
        %v2821 = vpop.trf.xlu0
        %2822 = vxpose.xlu0.b32.start [1/16] %v2665, 128
        %2823 = vxpose.xlu0.b32.cont [2/16] %v2666, 128
        %2824 = vxpose.xlu0.b32.cont [3/16] %v2667, 128
        %2825 = vxpose.xlu0.b32.cont [4/16] %v2668, 128
        %2826 = vxpose.xlu0.b32.cont [5/16] %v2669, 128
        %2827 = vxpose.xlu0.b32.cont [6/16] %v2670, 128
        %2828 = vxpose.xlu0.b32.cont [7/16] %v2671, 128
        %2829 = vxpose.xlu0.b32.cont [8/16] %v2672, 128
        %2830 = vxpose.xlu0.b32.cont [9/16] %v2673, 128
        %2831 = vxpose.xlu0.b32.cont [10/16] %v2674, 128
        %2832 = vxpose.xlu0.b32.cont [11/16] %v2675, 128
        %2833 = vxpose.xlu0.b32.cont [12/16] %v2676, 128
        %2834 = vxpose.xlu0.b32.cont [13/16] %v2677, 128
        %2835 = vxpose.xlu0.b32.cont [14/16] %v2678, 128
        %2836 = vxpose.xlu0.b32.cont [15/16] %v2679, 128
        %2837 = vxpose.xlu0.b32.end [16/16] %v2680, 128
        %v2838 = vpop.trf.xlu0
        %v2839 = vpop.trf.xlu0
        %v2840 = vpop.trf.xlu0
        %v2841 = vpop.trf.xlu0
        %v2842 = vpop.trf.xlu0
        %v2843 = vpop.trf.xlu0
        %v2844 = vpop.trf.xlu0
        %v2845 = vpop.trf.xlu0
        %v2846 = vpop.trf.xlu0
        %v2847 = vpop.trf.xlu0
        %v2848 = vpop.trf.xlu0
        %v2849 = vpop.trf.xlu0
        %v2850 = vpop.trf.xlu0
        %v2851 = vpop.trf.xlu0
        %v2852 = vpop.trf.xlu0
        %v2853 = vpop.trf.xlu0
        %2854 = vst [vmem:[%s215] sm:$0xff] %v2806
        %2855 = vst [vmem:[%s215 + $0x8] sm:$0xff] %v2838
        %s2856 = sand.u32 %s114, 1
        %s2857 = scalar_lea.sflag [#allocation3], %s2856
        %s2858 = sand.u32 %s114, 1
        %s2859 = smul.addr %s2858, 16
        %s2860 = scalar_lea.vmem [#allocation2], %s2859
        %s2861 = sand.u32 %s142, 1
        %s2862 = scalar_lea.sflag [#allocation5], %s2861
        %s2863 = sand.u32 %s142, 1
        %s2864 = smul.addr %s2863, 2
        %s2865 = scalar_lea.vmem [#allocation4], %s2864
        // Predicated region
        $region33: #{tpu_custom_call.1} parent=31 // pred_check
          %p2866 = pneg %p124
        $region34: #{tpu_custom_call.1} parent=31 // pred_check_branch
          %2868 = sbr.rel (%p2866) target = $region36
        $region35: #{tpu_custom_call.1} parent=31 // pred_region
          %s2869 = smul.u32 2, %s27
          %2871 = vsyncadd %s2857, 0
          %s2872 = smul.addr %s26, 2
          %s2873 = sadd.s32 %s2869, %s2872
          %s2874 = smul.addr %s2873, 8
          %s2875 = scalar_lea.hbm %s3, %s2874
          %s2877 = sshll.u32 %s2860, 4
          %s2878 = int_to_ptr.vmem [resolvable:$true] %s2877
          %s2879 = sshll.u32 %s2875, 4
          %s2880 = int_to_ptr.hbm [resolvable:$true] %s2879
          %2882 = dma.vmem_to_hbm [thread:$0]  %s2878, 256, %s2880, %s2857
        $region36: #{tpu_custom_call.1} parent=31 // pred_fallthru
          _
        // Predicated region
        $region37: #{tpu_custom_call.1} parent=31 // pred_check
          %p2883 = pneg %p152
        $region38: #{tpu_custom_call.1} parent=31 // pred_check_branch
          %2885 = sbr.rel (%p2883) target = $region40
        $region39: #{tpu_custom_call.1} parent=31 // pred_region
          %s2886 = sadd.s32 %s26, %s27
          %2888 = vsyncadd %s2862, 0
          %s2889 = smul.addr %s2886, 2
          %s2890 = scalar_lea.hbm %s4, %s2889
          %s2892 = sshll.u32 %s2865, 4
          %s2893 = int_to_ptr.vmem [resolvable:$true] %s2892
          %s2894 = sshll.u32 %s2890, 4
          %s2895 = int_to_ptr.hbm [resolvable:$true] %s2894
          %2897 = dma.vmem_to_hbm [thread:$0]  %s2893, 32, %s2895, %s2862
        $region40: #{tpu_custom_call.1} parent=31 // pred_fallthru
          _
      $region32: #{tpu_custom_call.1} parent=5 // pred_fallthru
        _
      %p2898 = scmp.le.s32.totalorder 2, %s17
      // Predicated region
      $region41: #{tpu_custom_call.1} parent=5 // pred_check
        %p2899 = pneg %p2898
      $region42: #{tpu_custom_call.1} parent=5 // pred_check_branch
        %2901 = sbr.rel (%p2899) target = $region44
      $region43: #{tpu_custom_call.1} parent=5 // pred_region
        %s2902 = ssub.s32 %s17, 2
        // Predicated region
        $region45: #{tpu_custom_call.1} parent=43 // pred_check
          %p2903 = pneg %p130
        $region46: #{tpu_custom_call.1} parent=43 // pred_check_branch
          %2905 = sbr.rel (%p2903) target = $region48
        $region47: #{tpu_custom_call.1} parent=43 // pred_region
          %s2906 = sand.u32 %s115, 1
          %s2907 = scalar_lea.sflag [#allocation3], %s2906
          %s2908 = sand.u32 %s115, 1
          %s2909 = smul.addr %s2908, 16
          %s2910 = scalar_lea.vmem [#allocation2], %s2909
          %2912 = dma.done %s2907, 256
        $region48: #{tpu_custom_call.1} parent=43 // pred_fallthru
          _
        // Predicated region
        $region49: #{tpu_custom_call.1} parent=43 // pred_check
          %p2913 = pneg %p158
        $region50: #{tpu_custom_call.1} parent=43 // pred_check_branch
          %2915 = sbr.rel (%p2913) target = $region52
        $region51: #{tpu_custom_call.1} parent=43 // pred_region
          %s2916 = sand.u32 %s143, 1
          %s2917 = scalar_lea.sflag [#allocation5], %s2916
          %s2918 = sand.u32 %s143, 1
          %s2919 = smul.addr %s2918, 2
          %s2920 = scalar_lea.vmem [#allocation4], %s2919
          %2922 = dma.done %s2917, 32
        $region52: #{tpu_custom_call.1} parent=43 // pred_fallthru
          _
      $region44: #{tpu_custom_call.1} parent=5 // pred_fallthru
        _
    $region6: #{tpu_custom_call.1} parent=1 // loop_footer
      %s21 = sadd.s32 1, %s17
    $region7: #{tpu_custom_call.1} parent=1 // loop_footer_branch
      %16 = sbr.rel target = $region3
    $region8: #{tpu_custom_call.1} parent=1 // loop_exit
      _
    %2923 = vsyncpa [#allocation3], 1
    %s2924 = scalar_lea.sflag [#allocation3], 1
    %2925 = vsyncpa %s2924, 1
    %2926 = vsyncpa [#allocation5], 1
    %s2927 = scalar_lea.sflag [#allocation5], 1
    %2928 = vsyncpa %s2927, 1

</llo_original>
